<compile_context>
chip_gen: v7x
topology: tpu7x:2x2x1
jax: 0.10.0
libtpu: 0.0.40
codegen_flags: <defaults>
</compile_context>

<pallas_src>
import functools

import jax
import jax.numpy as jnp
from jax import lax
from jax.experimental import pallas as pl
from jax.experimental.pallas import tpu as pltpu


_SQUEEZE = pl.Squeezed() if hasattr(pl, "Squeezed") else None

# Row layout of the packed per-layer vector tensor (L, 10, max_dim):
#   0:bq 1:bk 2:bv 3:bo 4:ln1_g 5:ln1_b 6:b1 7:b2 8:ln2_g 9:ln2_b
_NVEC = 10


# ----------------------------------------------------------------------------
# Pallas kernel: one grid step = one layer applied to one batch block.
# ----------------------------------------------------------------------------
def encoder_stack_kernel(
    x_ref,        # (bb, S, D)   original input (read only at layer 0)
    pe_ref,       # (S, D)       positional encoding
    wqkv_ref,     # (D, 3*H*dq)  bf16, fused Q/K/V projection
    wo_ref,       # (H*dq, D)    bf16, output projection
    w1_ref,       # (D, F)       bf16
    w2_ref,       # (F, D)       bf16
    vec_ref,      # (10, Vmax)   f32, packed biases / LN params
    out_ref,      # (bb, S, D)   resident activation / final output
    ctx_ref,      # (bb*S, H*dq) f32 scratch: per-head contexts
    *, num_heads,
):
    layer = pl.program_id(1)

    # Layer 0: initialize the resident activation with src + positional encoding.
    @pl.when(layer == 0)
    def _():
        out_ref[...] = (x_ref[...].astype(jnp.float32)
                        + pe_ref[...].astype(jnp.float32)).astype(out_ref.dtype)

    bb, S, D = out_ref.shape
    N = bb * S
    hdq = wo_ref.shape[0]
    F = w1_ref.shape[-1]
    H = num_heads
    dq = hdq // H
    inv_scale = 1.0 / (float(dq) ** 0.5)

    x = out_ref[...].astype(jnp.float32).reshape(N, D)   # fill sublanes
    xb = x.astype(jnp.bfloat16)

    # --- fused Q/K/V projection (single bf16 matmul, f32 accumulation) -------
    qkv = jnp.dot(xb, wqkv_ref[...], preferred_element_type=jnp.float32)  # (N, 3*hdq)
    q = (qkv[:, 0 * hdq:1 * hdq] + vec_ref[0:1, 0:hdq]).reshape(bb, S, hdq)
    k = (qkv[:, 1 * hdq:2 * hdq] + vec_ref[1:2, 0:hdq]).reshape(bb, S, hdq)
    v = (qkv[:, 2 * hdq:3 * hdq] + vec_ref[2:3, 0:hdq]).reshape(bb, S, hdq)
    qb = q.astype(jnp.bfloat16)
    kb = k.astype(jnp.bfloat16)
    vb = v.astype(jnp.bfloat16)

    # --- per-head scaled dot-product attention; contexts to scratch ----------
    # TODO(synk): flash-style KV tiling here for realistic S (scores stay dense).
    for h in range(H):
        sl = slice(h * dq, (h + 1) * dq)
        s = jnp.einsum('bsd,btd->bst', qb[:, :, sl], kb[:, :, sl],
                       preferred_element_type=jnp.float32) * inv_scale
        m = jnp.max(s, axis=-1, keepdims=True)
        e = jnp.exp(s - m)
        denom = jnp.sum(e, axis=-1, keepdims=True)
        p = (e * pl.reciprocal(denom, approx=True)).astype(jnp.bfloat16)  # EUP slot
        ctx = jnp.einsum('bst,btd->bsd', p, vb[:, :, sl],
                         preferred_element_type=jnp.float32)              # (bb, S, dq)
        ctx_ref[:, sl] = ctx.reshape(N, dq)

    # --- single fused output projection (K = H*dq) ----------------------------
    attn = jnp.dot(ctx_ref[...].astype(jnp.bfloat16), wo_ref[...],
                   preferred_element_type=jnp.float32) + vec_ref[3:4, 0:D]

    # --- residual + LayerNorm 1 (fused moments) -------------------------------
    y = x + attn
    mu = jnp.mean(y, axis=-1, keepdims=True)
    ms = jnp.mean(y * y, axis=-1, keepdims=True)
    var = ms - mu * mu
    y = (y - mu) * lax.rsqrt(var + 1e-5) * vec_ref[4:5, 0:D] + vec_ref[5:6, 0:D]

    # --- feed-forward (bf16 operands, f32 accumulation) -----------------------
    h1 = jnp.dot(y.astype(jnp.bfloat16), w1_ref[...],
                 preferred_element_type=jnp.float32) + vec_ref[6:7, 0:F]
    h1 = jnp.maximum(h1, 0.0)
    ff = jnp.dot(h1.astype(jnp.bfloat16), w2_ref[...],
                 preferred_element_type=jnp.float32) + vec_ref[7:8, 0:D]

    # --- residual + LayerNorm 2 ------------------------------------------------
    z = y + ff
    mu2 = jnp.mean(z, axis=-1, keepdims=True)
    ms2 = jnp.mean(z * z, axis=-1, keepdims=True)
    var2 = ms2 - mu2 * mu2
    z = (z - mu2) * lax.rsqrt(var2 + 1e-5) * vec_ref[8:9, 0:D] + vec_ref[9:10, 0:D]

    out_ref[...] = z.reshape(bb, S, D).astype(out_ref.dtype)


# ----------------------------------------------------------------------------
# Wrapper helpers
# ----------------------------------------------------------------------------
def _tpu_info_attr(name, default):
    try:
        info = pltpu.get_tpu_info()
        val = getattr(info, name, None)
        if isinstance(val, int) and val > 0:
            return val
    except Exception:
        pass
    return default


def _default_batch_block(B):
    """B // num_tensorcores when it can be queried (feeds both TCs on v7x)."""
    n_tc = 1
    for attr in ("num_cores", "cores_per_chip", "num_tensorcores"):
        n_tc = _tpu_info_attr(attr, n_tc)
        if n_tc > 1:
            break
    bb = max(B // max(n_tc, 1), 1)
    while B % bb:
        bb -= 1
    return bb


def _vmem_limit_bytes(bb, S, D, hdq, F, nvec, vmax):
    # double-buffered bf16 weight streams + f32 vector pack
    weights = 2 * 2 * (D * 3 * hdq + hdq * D + D * F + F * D) + 2 * 4 * nvec * vmax
    # resident activation (double-buffered out) + streamed input block + PE
    acts = 4 * (2 * bb * S * D + 2 * bb * S * D + S * D)
    # in-kernel live tensors: qkv, q/k/v, ctx scratch, FFN hidden, per-head scores
    scratch = 4 * (bb * S * 3 * hdq + 3 * bb * S * hdq + bb * S * hdq
                   + bb * S * F + 2 * bb * S * S)
    budget = max(int((weights + acts + scratch) * 1.5) + (8 << 20), 32 << 20)
    cap = _tpu_info_attr("vmem_capacity_bytes", 64 << 20)
    return min(budget, int(cap * 0.9))


def transformer_encoder_pallas(src, params, *, num_heads, batch_block=None):
    """params: dict of stacked arrays {wqkv, wo, w1, w2 (bf16), vec (f32)}."""
    B, S, D = src.shape
    L = params["wqkv"].shape[0]
    hdq = params["wo"].shape[1]
    F = params["w1"].shape[2]
    nvec, vmax = params["vec"].shape[1:]

    bb = _default_batch_block(B) if batch_block is None else batch_block
    assert B % bb == 0, "batch_block must divide the batch size"

    pe = position_encoding(S, D).astype(jnp.float32)[0]          # (S, D)

    act_map = lambda i, l: (i, 0, 0)
    pe_map = lambda i, l: (0, 0)
    w_map = lambda i, l: (l, 0, 0)

    in_specs = [
        pl.BlockSpec((bb, S, D), act_map),
        pl.BlockSpec((S, D), pe_map),
        pl.BlockSpec((_SQUEEZE, D, 3 * hdq), w_map),
        pl.BlockSpec((_SQUEEZE, hdq, D), w_map),
        pl.BlockSpec((_SQUEEZE, D, F), w_map),
        pl.BlockSpec((_SQUEEZE, F, D), w_map),
        pl.BlockSpec((_SQUEEZE, nvec, vmax), w_map),
    ]

    kernel = functools.partial(encoder_stack_kernel, num_heads=num_heads)

    return pl.pallas_call(
        kernel,
        out_shape=jax.ShapeDtypeStruct((B, S, D), jnp.float32),
        grid=(B // bb, L),
        in_specs=in_specs,
        out_specs=pl.BlockSpec((bb, S, D), act_map),
        scratch_shapes=[pltpu.VMEM((bb * S, hdq), jnp.float32)],
        compiler_params=pltpu.CompilerParams(
            dimension_semantics=("parallel", "arbitrary"),
            vmem_limit_bytes=_vmem_limit_bytes(bb, S, D, hdq, F, nvec, vmax)),
    )(src.astype(jnp.float32), pe, params["wqkv"], params["wo"],
      params["w1"], params["w2"], params["vec"])


# ----------------------------------------------------------------------------
# Parameter setup (plain JAX) — lane-dense layouts, bf16 weights, packed vectors
# ----------------------------------------------------------------------------
def position_encoding(seq_len, dim_model):
    pos = jnp.arange(seq_len, dtype=jnp.float32).reshape(1, -1, 1)
    dim = jnp.arange(dim_model, dtype=jnp.float32).reshape(1, 1, -1)
    phase = pos / (10000.0 ** (dim / dim_model))
    return jnp.where(dim.astype(jnp.int32) % 2 == 0, jnp.sin(phase), jnp.cos(phase))


def init_layer_params(key, dim_model, num_heads, dim_ff):
    dq = max(dim_model // num_heads, 1)
    hdq = num_heads * dq
    ks = jax.random.split(key, 12)
    s = 0.05
    rnd = lambda k, shape: (jax.random.normal(k, shape) * s).astype(jnp.float32)
    f32 = jnp.float32
    return dict(
        wq=rnd(ks[0], (dim_model, hdq)), bq=rnd(ks[1], (hdq,)),
        wk=rnd(ks[2], (dim_model, hdq)), bk=rnd(ks[3], (hdq,)),
        wv=rnd(ks[4], (dim_model, hdq)), bv=rnd(ks[5], (hdq,)),
        wo=rnd(ks[6], (hdq, dim_model)), bo=rnd(ks[7], (dim_model,)),
        ln1_g=jnp.ones((dim_model,), f32), ln1_b=jnp.zeros((dim_model,), f32),
        w1=rnd(ks[8], (dim_model, dim_ff)), b1=rnd(ks[9], (dim_ff,)),
        w2=rnd(ks[10], (dim_ff, dim_model)), b2=rnd(ks[11], (dim_model,)),
        ln2_g=jnp.ones((dim_model,), f32), ln2_b=jnp.zeros((dim_model,), f32),
    )


def pack_params(layers, dim_model, num_heads, dim_ff):
    """Stack per-layer params: bf16 weight streams + one packed f32 vector tensor."""
    dq = max(dim_model // num_heads, 1)
    hdq = num_heads * dq
    vmax = max(hdq, dim_model, dim_ff)
    wqkv, wo, w1, w2, vecs = [], [], [], [], []
    for p in layers:
        wqkv.append(jnp.concatenate([p["wq"], p["wk"], p["wv"]], axis=-1))
        wo.append(p["wo"]); w1.append(p["w1"]); w2.append(p["w2"])
        rows = [p["bq"], p["bk"], p["bv"], p["bo"], p["ln1_g"], p["ln1_b"],
                p["b1"], p["b2"], p["ln2_g"], p["ln2_b"]]
        vecs.append(jnp.stack(
            [jnp.pad(r, (0, vmax - r.shape[0])) for r in rows], axis=0))
    return dict(
        wqkv=jnp.stack(wqkv).astype(jnp.bfloat16),
        wo=jnp.stack(wo).astype(jnp.bfloat16),
        w1=jnp.stack(w1).astype(jnp.bfloat16),
        w2=jnp.stack(w2).astype(jnp.bfloat16),
        vec=jnp.stack(vecs).astype(jnp.float32),
    )


# ----------------------------------------------------------------------------
# Pure-JAX reference (same math as the PyTorch module, same bf16 weight values)
# ----------------------------------------------------------------------------
def transformer_encoder_ref(src, params, num_heads):
    B, S, D = src.shape
    x = src + position_encoding(S, D)[0]
    L = params["wqkv"].shape[0]
    hdq = params["wo"].shape[1]
    F = params["w1"].shape[2]
    dq = hdq // num_heads

    def ln(y, g, b):
        mu = y.mean(-1, keepdims=True)
        var = ((y - mu) ** 2).mean(-1, keepdims=True)
        return (y - mu) / jnp.sqrt(var + 1e-5) * g + b

    for l in range(L):
        wqkv = params["wqkv"][l].astype(jnp.float32)
        wo = params["wo"][l].astype(jnp.float32)
        w1 = params["w1"][l].astype(jnp.float32)
        w2 = params["w2"][l].astype(jnp.float32)
        vec = params["vec"][l]
        bq, bk, bv = vec[0, :hdq], vec[1, :hdq], vec[2, :hdq]
        bo, g1, b1n = vec[3, :D], vec[4, :D], vec[5, :D]
        b1, b2 = vec[6, :F], vec[7, :D]
        g2, b2n = vec[8, :D], vec[9, :D]
        wq, wk, wv = wqkv[:, :hdq], wqkv[:, hdq:2 * hdq], wqkv[:, 2 * hdq:]
        q = x @ wq + bq
        k = x @ wk + bk
        v = x @ wv + bv
        heads = []
        for h in range(num_heads):
            sl = slice(h * dq, (h + 1) * dq)
            sc = jnp.einsum('bsd,btd->bst', q[..., sl], k[..., sl]) / (dq ** 0.5)
            p = jax.nn.softmax(sc, axis=-1)
            heads.append(jnp.einsum('bst,btd->bsd', p, v[..., sl]))
        attn = jnp.concatenate(heads, -1) @ wo + bo
        y = ln(x + attn, g1, b1n)
        ff = jnp.maximum(y @ w1 + b1, 0.0) @ w2 + b2
        x = ln(y + ff, g2, b2n)
    return x


if __name__ == "__main__":
    # small, module-consistent shapes
    B, S, D = 2, 8, 32
    NUM_HEADS, DIM_FF, NUM_LAYERS = 4, 64, 2

    key = jax.random.PRNGKey(0)
    k_x, *k_layers = jax.random.split(key, 1 + NUM_LAYERS)
    src = jax.random.normal(k_x, (B, S, D), dtype=jnp.float32)

    layers = [init_layer_params(k, D, NUM_HEADS, DIM_FF) for k in k_layers]
    params = pack_params(layers, D, NUM_HEADS, DIM_FF)

    out = transformer_encoder_pallas(src, params, num_heads=NUM_HEADS)
    out = jax.block_until_ready(out)

    ref = transformer_encoder_ref(src, params, NUM_HEADS)
    assert out.shape == (B, S, D)
    # tolerance covers bf16 matmul operands + EUP approx-reciprocal softmax denom
    err = jnp.max(jnp.abs(out - ref))
    assert jnp.allclose(out, ref, atol=5e-2, rtol=5e-2), f"mismatch vs reference (max abs err {err})"

    print("KERNEL_OK")
</pallas_src>

<mosaic_0001>
module attributes {stable_mosaic.version = 11 : i64} {
  func.func @encoder_stack_kernel(%arg0: i32, %arg1: i32, %arg2: memref<2x8x32xf32, #tpu.memory_space<vmem>>, %arg3: memref<8x32xf32, #tpu.memory_space<vmem>>, %arg4: memref<1x32x96xbf16, #tpu.memory_space<vmem>>, %arg5: memref<1x32x32xbf16, #tpu.memory_space<vmem>>, %arg6: memref<1x32x64xbf16, #tpu.memory_space<vmem>>, %arg7: memref<1x64x32xbf16, #tpu.memory_space<vmem>>, %arg8: memref<1x10x64xf32, #tpu.memory_space<vmem>>, %arg9: memref<2x8x32xf32, #tpu.memory_space<vmem>>, %arg10: memref<16x32xf32, #tpu.memory_space<vmem>>) attributes {dimension_semantics = [#tpu.dimension_semantics<parallel>, #tpu.dimension_semantics<arbitrary>], iteration_bounds = array<i64: 1, 2>, scalar_prefetch = 0 : i64, scratch_operands = 1 : i64, tpu.core_type = #tpu.core_type<tc>, window_params = [{transform_indices = @transform_0, window_bounds = array<i64: 2, 8, 32>}, {pipeline_mode = #tpu.pipeline_mode<synchronous>, transform_indices = @transform_1, window_bounds = array<i64: 8, 32>}, {transform_indices = @transform_2, window_bounds = array<i64: 1, 32, 96>}, {transform_indices = @transform_3, window_bounds = array<i64: 1, 32, 32>}, {transform_indices = @transform_4, window_bounds = array<i64: 1, 32, 64>}, {transform_indices = @transform_5, window_bounds = array<i64: 1, 64, 32>}, {transform_indices = @transform_6, window_bounds = array<i64: 1, 10, 64>}, {transform_indices = @transform_7, window_bounds = array<i64: 2, 8, 32>}]} {
    %c0_i32 = arith.constant 0 : i32
    %0 = arith.cmpi eq, %arg1, %c0_i32 : i32
    %1 = arith.extui %0 : i1 to i32
    %c0_i32_0 = arith.constant 0 : i32
    %2 = arith.cmpi ne, %1, %c0_i32_0 : i32
    scf.if %2 {
      %c0_81 = arith.constant 0 : index
      %c0_82 = arith.constant 0 : index
      %c0_83 = arith.constant 0 : index
      %193 = vector.load %arg2[%c0_81, %c0_82, %c0_83] : memref<2x8x32xf32, #tpu.memory_space<vmem>>, vector<2x8x32xf32>
      %c0_84 = arith.constant 0 : index
      %c0_85 = arith.constant 0 : index
      %194 = vector.load %arg3[%c0_84, %c0_85] : memref<8x32xf32, #tpu.memory_space<vmem>>, vector<8x32xf32>
      %195 = vector.shape_cast %194 : vector<8x32xf32> to vector<1x8x32xf32>
      %196 = vector.broadcast %195 : vector<1x8x32xf32> to vector<2x8x32xf32>
      %197 = arith.addf %193, %196 : vector<2x8x32xf32>
      %c0_86 = arith.constant 0 : index
      %c0_87 = arith.constant 0 : index
      %c0_88 = arith.constant 0 : index
      %198 = vector.load %arg9[%c0_86, %c0_87, %c0_88] : memref<2x8x32xf32, #tpu.memory_space<vmem>>, vector<2x8x32xf32>
      tpu.vector_store %arg9[%c0_86, %c0_87, %c0_88], %197 {strides = array<i32>} : memref<2x8x32xf32, #tpu.memory_space<vmem>>, vector<2x8x32xf32>,
    } else {
    }
    %c0 = arith.constant 0 : index
    %c0_1 = arith.constant 0 : index
    %c0_2 = arith.constant 0 : index
    %3 = vector.load %arg9[%c0, %c0_1, %c0_2] : memref<2x8x32xf32, #tpu.memory_space<vmem>>, vector<2x8x32xf32>
    %4 = vector.shape_cast %3 : vector<2x8x32xf32> to vector<16x32xf32>
    %5 = arith.truncf %4 : vector<16x32xf32> to vector<16x32xbf16>
    %c0_3 = arith.constant 0 : index
    %c0_4 = arith.constant 0 : index
    %c0_5 = arith.constant 0 : index
    %6 = vector.load %arg4[%c0_3, %c0_4, %c0_5] : memref<1x32x96xbf16, #tpu.memory_space<vmem>>, vector<1x32x96xbf16>
    %7 = vector.shape_cast %6 : vector<1x32x96xbf16> to vector<32x96xbf16>
    %cst = arith.constant dense<0.000000e+00> : vector<16x96xf32>
    %8 = tpu.matmul %5, %7, %cst {dimension_numbers = #tpu.dot_dimension_numbers<[1], [0], [0], [1], [0, 0, 1, 1], [], []>} : vector<16x32xbf16>, vector<32x96xbf16>, vector<16x96xf32> -> vector<16x96xf32>
    %9 = vector.extract_strided_slice %8 {offsets = [0, 0], sizes = [16, 32], strides = [1, 1]} : vector<16x96xf32> to vector<16x32xf32>
    %c0_6 = arith.constant 0 : index
    %c0_7 = arith.constant 0 : index
    %c0_8 = arith.constant 0 : index
    %10 = vector.load %arg8[%c0_6, %c0_7, %c0_8] : memref<1x10x64xf32, #tpu.memory_space<vmem>>, vector<1x1x32xf32>
    %11 = vector.shape_cast %10 : vector<1x1x32xf32> to vector<1x32xf32>
    %12 = vector.broadcast %11 : vector<1x32xf32> to vector<16x32xf32>
    %13 = arith.addf %9, %12 : vector<16x32xf32>
    %14 = vector.shape_cast %13 : vector<16x32xf32> to vector<2x8x32xf32>
    %15 = vector.extract_strided_slice %8 {offsets = [0, 32], sizes = [16, 32], strides = [1, 1]} : vector<16x96xf32> to vector<16x32xf32>
    %c0_9 = arith.constant 0 : index
    %c1 = arith.constant 1 : index
    %c0_10 = arith.constant 0 : index
    %16 = vector.load %arg8[%c0_9, %c1, %c0_10] : memref<1x10x64xf32, #tpu.memory_space<vmem>>, vector<1x1x32xf32>
    %17 = vector.shape_cast %16 : vector<1x1x32xf32> to vector<1x32xf32>
    %18 = vector.broadcast %17 : vector<1x32xf32> to vector<16x32xf32>
    %19 = arith.addf %15, %18 : vector<16x32xf32>
    %20 = vector.shape_cast %19 : vector<16x32xf32> to vector<2x8x32xf32>
    %21 = vector.extract_strided_slice %8 {offsets = [0, 64], sizes = [16, 32], strides = [1, 1]} : vector<16x96xf32> to vector<16x32xf32>
    %c0_11 = arith.constant 0 : index
    %c2 = arith.constant 2 : index
    %c0_12 = arith.constant 0 : index
    %22 = vector.load %arg8[%c0_11, %c2, %c0_12] : memref<1x10x64xf32, #tpu.memory_space<vmem>>, vector<1x1x32xf32>
    %23 = vector.shape_cast %22 : vector<1x1x32xf32> to vector<1x32xf32>
    %24 = vector.broadcast %23 : vector<1x32xf32> to vector<16x32xf32>
    %25 = arith.addf %21, %24 : vector<16x32xf32>
    %26 = vector.shape_cast %25 : vector<16x32xf32> to vector<2x8x32xf32>
    %27 = arith.truncf %14 : vector<2x8x32xf32> to vector<2x8x32xbf16>
    %28 = arith.truncf %20 : vector<2x8x32xf32> to vector<2x8x32xbf16>
    %29 = arith.truncf %26 : vector<2x8x32xf32> to vector<2x8x32xbf16>
    %30 = vector.extract_strided_slice %27 {offsets = [0, 0, 0], sizes = [2, 8, 8], strides = [1, 1, 1]} : vector<2x8x32xbf16> to vector<2x8x8xbf16>
    %31 = vector.extract_strided_slice %28 {offsets = [0, 0, 0], sizes = [2, 8, 8], strides = [1, 1, 1]} : vector<2x8x32xbf16> to vector<2x8x8xbf16>
    "tpu.trace_start"() <{level = 10 : i32, message = "bsd,btd->bst"}> : () -> ()
    %cst_13 = arith.constant dense<0.000000e+00> : vector<2x8x8xf32>
    %32 = tpu.matmul %30, %31, %cst_13 {dimension_numbers = #tpu.dot_dimension_numbers<[2], [2], [1], [1], [0, 0, 0, 1, 1, 1], [0], [0]>} : vector<2x8x8xbf16>, vector<2x8x8xbf16>, vector<2x8x8xf32> -> vector<2x8x8xf32>
    "tpu.trace_stop"() : () -> ()
    %cst_14 = arith.constant 0.353553385 : f32
    %33 = vector.broadcast %cst_14 : f32 to vector<2x8x8xf32>
    %34 = arith.mulf %32, %33 : vector<2x8x8xf32>
    %cst_15 = arith.constant dense<0xFF800000> : vector<2x8xf32>
    %35 = vector.multi_reduction <maximumf>, %34, %cst_15 [2] : vector<2x8x8xf32> to vector<2x8xf32>
    %36 = vector.shape_cast %35 : vector<2x8xf32> to vector<2x8x1xf32>
    %37 = vector.broadcast %36 : vector<2x8x1xf32> to vector<2x8x8xf32>
    %38 = arith.subf %34, %37 : vector<2x8x8xf32>
    %39 = math.exp %38 : vector<2x8x8xf32>
    %cst_16 = arith.constant dense<0.000000e+00> : vector<2x8xf32>
    %40 = vector.multi_reduction <add>, %39, %cst_16 [2] : vector<2x8x8xf32> to vector<2x8xf32>
    %41 = vector.shape_cast %40 : vector<2x8xf32> to vector<2x8x1xf32>
    %42 = tpu.reciprocal %41 {approx = true} : vector<2x8x1xf32> -> vector<2x8x1xf32>
    %43 = vector.broadcast %42 : vector<2x8x1xf32> to vector<2x8x8xf32>
    %44 = arith.mulf %39, %43 : vector<2x8x8xf32>
    %45 = arith.truncf %44 : vector<2x8x8xf32> to vector<2x8x8xbf16>
    %46 = vector.extract_strided_slice %29 {offsets = [0, 0, 0], sizes = [2, 8, 8], strides = [1, 1, 1]} : vector<2x8x32xbf16> to vector<2x8x8xbf16>
    "tpu.trace_start"() <{level = 10 : i32, message = "bst,btd->bsd"}> : () -> ()
    %cst_17 = arith.constant dense<0.000000e+00> : vector<2x8x8xf32>
    %47 = tpu.matmul %45, %46, %cst_17 {dimension_numbers = #tpu.dot_dimension_numbers<[2], [1], [1], [2], [0, 0, 0, 1, 1, 2], [0], [0]>} : vector<2x8x8xbf16>, vector<2x8x8xbf16>, vector<2x8x8xf32> -> vector<2x8x8xf32>
    "tpu.trace_stop"() : () -> ()
    %48 = vector.shape_cast %47 : vector<2x8x8xf32> to vector<16x8xf32>
    %c0_18 = arith.constant 0 : index
    %c0_19 = arith.constant 0 : index
    %49 = vector.load %arg10[%c0_18, %c0_19] : memref<16x32xf32, #tpu.memory_space<vmem>>, vector<16x8xf32>
    tpu.vector_store %arg10[%c0_18, %c0_19], %48 {strides = array<i32>} : memref<16x32xf32, #tpu.memory_space<vmem>>, vector<16x8xf32>,
    %50 = vector.extract_strided_slice %27 {offsets = [0, 0, 8], sizes = [2, 8, 8], strides = [1, 1, 1]} : vector<2x8x32xbf16> to vector<2x8x8xbf16>
    %51 = vector.extract_strided_slice %28 {offsets = [0, 0, 8], sizes = [2, 8, 8], strides = [1, 1, 1]} : vector<2x8x32xbf16> to vector<2x8x8xbf16>
    "tpu.trace_start"() <{level = 10 : i32, message = "bsd,btd->bst"}> : () -> ()
    %cst_20 = arith.constant dense<0.000000e+00> : vector<2x8x8xf32>
    %52 = tpu.matmul %50, %51, %cst_20 {dimension_numbers = #tpu.dot_dimension_numbers<[2], [2], [1], [1], [0, 0, 0, 1, 1, 1], [0], [0]>} : vector<2x8x8xbf16>, vector<2x8x8xbf16>, vector<2x8x8xf32> -> vector<2x8x8xf32>
    "tpu.trace_stop"() : () -> ()
    %cst_21 = arith.constant 0.353553385 : f32
    %53 = vector.broadcast %cst_21 : f32 to vector<2x8x8xf32>
    %54 = arith.mulf %52, %53 : vector<2x8x8xf32>
    %cst_22 = arith.constant dense<0xFF800000> : vector<2x8xf32>
    %55 = vector.multi_reduction <maximumf>, %54, %cst_22 [2] : vector<2x8x8xf32> to vector<2x8xf32>
    %56 = vector.shape_cast %55 : vector<2x8xf32> to vector<2x8x1xf32>
    %57 = vector.broadcast %56 : vector<2x8x1xf32> to vector<2x8x8xf32>
    %58 = arith.subf %54, %57 : vector<2x8x8xf32>
    %59 = math.exp %58 : vector<2x8x8xf32>
    %cst_23 = arith.constant dense<0.000000e+00> : vector<2x8xf32>
    %60 = vector.multi_reduction <add>, %59, %cst_23 [2] : vector<2x8x8xf32> to vector<2x8xf32>
    %61 = vector.shape_cast %60 : vector<2x8xf32> to vector<2x8x1xf32>
    %62 = tpu.reciprocal %61 {approx = true} : vector<2x8x1xf32> -> vector<2x8x1xf32>
    %63 = vector.broadcast %62 : vector<2x8x1xf32> to vector<2x8x8xf32>
    %64 = arith.mulf %59, %63 : vector<2x8x8xf32>
    %65 = arith.truncf %64 : vector<2x8x8xf32> to vector<2x8x8xbf16>
    %66 = vector.extract_strided_slice %29 {offsets = [0, 0, 8], sizes = [2, 8, 8], strides = [1, 1, 1]} : vector<2x8x32xbf16> to vector<2x8x8xbf16>
    "tpu.trace_start"() <{level = 10 : i32, message = "bst,btd->bsd"}> : () -> ()
    %cst_24 = arith.constant dense<0.000000e+00> : vector<2x8x8xf32>
    %67 = tpu.matmul %65, %66, %cst_24 {dimension_numbers = #tpu.dot_dimension_numbers<[2], [1], [1], [2], [0, 0, 0, 1, 1, 2], [0], [0]>} : vector<2x8x8xbf16>, vector<2x8x8xbf16>, vector<2x8x8xf32> -> vector<2x8x8xf32>
    "tpu.trace_stop"() : () -> ()
    %68 = vector.shape_cast %67 : vector<2x8x8xf32> to vector<16x8xf32>
    %c0_25 = arith.constant 0 : index
    %c8 = arith.constant 8 : index
    %69 = vector.load %arg10[%c0_25, %c8] : memref<16x32xf32, #tpu.memory_space<vmem>>, vector<16x8xf32>
    tpu.vector_store %arg10[%c0_25, %c8], %68 {strides = array<i32>} : memref<16x32xf32, #tpu.memory_space<vmem>>, vector<16x8xf32>,
    %70 = vector.extract_strided_slice %27 {offsets = [0, 0, 16], sizes = [2, 8, 8], strides = [1, 1, 1]} : vector<2x8x32xbf16> to vector<2x8x8xbf16>
    %71 = vector.extract_strided_slice %28 {offsets = [0, 0, 16], sizes = [2, 8, 8], strides = [1, 1, 1]} : vector<2x8x32xbf16> to vector<2x8x8xbf16>
    "tpu.trace_start"() <{level = 10 : i32, message = "bsd,btd->bst"}> : () -> ()
    %cst_26 = arith.constant dense<0.000000e+00> : vector<2x8x8xf32>
    %72 = tpu.matmul %70, %71, %cst_26 {dimension_numbers = #tpu.dot_dimension_numbers<[2], [2], [1], [1], [0, 0, 0, 1, 1, 1], [0], [0]>} : vector<2x8x8xbf16>, vector<2x8x8xbf16>, vector<2x8x8xf32> -> vector<2x8x8xf32>
    "tpu.trace_stop"() : () -> ()
    %cst_27 = arith.constant 0.353553385 : f32
    %73 = vector.broadcast %cst_27 : f32 to vector<2x8x8xf32>
    %74 = arith.mulf %72, %73 : vector<2x8x8xf32>
    %cst_28 = arith.constant dense<0xFF800000> : vector<2x8xf32>
    %75 = vector.multi_reduction <maximumf>, %74, %cst_28 [2] : vector<2x8x8xf32> to vector<2x8xf32>
    %76 = vector.shape_cast %75 : vector<2x8xf32> to vector<2x8x1xf32>
    %77 = vector.broadcast %76 : vector<2x8x1xf32> to vector<2x8x8xf32>
    %78 = arith.subf %74, %77 : vector<2x8x8xf32>
    %79 = math.exp %78 : vector<2x8x8xf32>
    %cst_29 = arith.constant dense<0.000000e+00> : vector<2x8xf32>
    %80 = vector.multi_reduction <add>, %79, %cst_29 [2] : vector<2x8x8xf32> to vector<2x8xf32>
    %81 = vector.shape_cast %80 : vector<2x8xf32> to vector<2x8x1xf32>
    %82 = tpu.reciprocal %81 {approx = true} : vector<2x8x1xf32> -> vector<2x8x1xf32>
    %83 = vector.broadcast %82 : vector<2x8x1xf32> to vector<2x8x8xf32>
    %84 = arith.mulf %79, %83 : vector<2x8x8xf32>
    %85 = arith.truncf %84 : vector<2x8x8xf32> to vector<2x8x8xbf16>
    %86 = vector.extract_strided_slice %29 {offsets = [0, 0, 16], sizes = [2, 8, 8], strides = [1, 1, 1]} : vector<2x8x32xbf16> to vector<2x8x8xbf16>
    "tpu.trace_start"() <{level = 10 : i32, message = "bst,btd->bsd"}> : () -> ()
    %cst_30 = arith.constant dense<0.000000e+00> : vector<2x8x8xf32>
    %87 = tpu.matmul %85, %86, %cst_30 {dimension_numbers = #tpu.dot_dimension_numbers<[2], [1], [1], [2], [0, 0, 0, 1, 1, 2], [0], [0]>} : vector<2x8x8xbf16>, vector<2x8x8xbf16>, vector<2x8x8xf32> -> vector<2x8x8xf32>
    "tpu.trace_stop"() : () -> ()
    %88 = vector.shape_cast %87 : vector<2x8x8xf32> to vector<16x8xf32>
    %c0_31 = arith.constant 0 : index
    %c16 = arith.constant 16 : index
    %89 = vector.load %arg10[%c0_31, %c16] : memref<16x32xf32, #tpu.memory_space<vmem>>, vector<16x8xf32>
    tpu.vector_store %arg10[%c0_31, %c16], %88 {strides = array<i32>} : memref<16x32xf32, #tpu.memory_space<vmem>>, vector<16x8xf32>,
    %90 = vector.extract_strided_slice %27 {offsets = [0, 0, 24], sizes = [2, 8, 8], strides = [1, 1, 1]} : vector<2x8x32xbf16> to vector<2x8x8xbf16>
    %91 = vector.extract_strided_slice %28 {offsets = [0, 0, 24], sizes = [2, 8, 8], strides = [1, 1, 1]} : vector<2x8x32xbf16> to vector<2x8x8xbf16>
    "tpu.trace_start"() <{level = 10 : i32, message = "bsd,btd->bst"}> : () -> ()
    %cst_32 = arith.constant dense<0.000000e+00> : vector<2x8x8xf32>
    %92 = tpu.matmul %90, %91, %cst_32 {dimension_numbers = #tpu.dot_dimension_numbers<[2], [2], [1], [1], [0, 0, 0, 1, 1, 1], [0], [0]>} : vector<2x8x8xbf16>, vector<2x8x8xbf16>, vector<2x8x8xf32> -> vector<2x8x8xf32>
    "tpu.trace_stop"() : () -> ()
    %cst_33 = arith.constant 0.353553385 : f32
    %93 = vector.broadcast %cst_33 : f32 to vector<2x8x8xf32>
    %94 = arith.mulf %92, %93 : vector<2x8x8xf32>
    %cst_34 = arith.constant dense<0xFF800000> : vector<2x8xf32>
    %95 = vector.multi_reduction <maximumf>, %94, %cst_34 [2] : vector<2x8x8xf32> to vector<2x8xf32>
    %96 = vector.shape_cast %95 : vector<2x8xf32> to vector<2x8x1xf32>
    %97 = vector.broadcast %96 : vector<2x8x1xf32> to vector<2x8x8xf32>
    %98 = arith.subf %94, %97 : vector<2x8x8xf32>
    %99 = math.exp %98 : vector<2x8x8xf32>
    %cst_35 = arith.constant dense<0.000000e+00> : vector<2x8xf32>
    %100 = vector.multi_reduction <add>, %99, %cst_35 [2] : vector<2x8x8xf32> to vector<2x8xf32>
    %101 = vector.shape_cast %100 : vector<2x8xf32> to vector<2x8x1xf32>
    %102 = tpu.reciprocal %101 {approx = true} : vector<2x8x1xf32> -> vector<2x8x1xf32>
    %103 = vector.broadcast %102 : vector<2x8x1xf32> to vector<2x8x8xf32>
    %104 = arith.mulf %99, %103 : vector<2x8x8xf32>
    %105 = arith.truncf %104 : vector<2x8x8xf32> to vector<2x8x8xbf16>
    %106 = vector.extract_strided_slice %29 {offsets = [0, 0, 24], sizes = [2, 8, 8], strides = [1, 1, 1]} : vector<2x8x32xbf16> to vector<2x8x8xbf16>
    "tpu.trace_start"() <{level = 10 : i32, message = "bst,btd->bsd"}> : () -> ()
    %cst_36 = arith.constant dense<0.000000e+00> : vector<2x8x8xf32>
    %107 = tpu.matmul %105, %106, %cst_36 {dimension_numbers = #tpu.dot_dimension_numbers<[2], [1], [1], [2], [0, 0, 0, 1, 1, 2], [0], [0]>} : vector<2x8x8xbf16>, vector<2x8x8xbf16>, vector<2x8x8xf32> -> vector<2x8x8xf32>
    "tpu.trace_stop"() : () -> ()
    %108 = vector.shape_cast %107 : vector<2x8x8xf32> to vector<16x8xf32>
    %c0_37 = arith.constant 0 : index
    %c24 = arith.constant 24 : index
    %109 = vector.load %arg10[%c0_37, %c24] : memref<16x32xf32, #tpu.memory_space<vmem>>, vector<16x8xf32>
    tpu.vector_store %arg10[%c0_37, %c24], %108 {strides = array<i32>} : memref<16x32xf32, #tpu.memory_space<vmem>>, vector<16x8xf32>,
    %c0_38 = arith.constant 0 : index
    %c0_39 = arith.constant 0 : index
    %110 = vector.load %arg10[%c0_38, %c0_39] : memref<16x32xf32, #tpu.memory_space<vmem>>, vector<16x32xf32>
    %111 = arith.truncf %110 : vector<16x32xf32> to vector<16x32xbf16>
    %c0_40 = arith.constant 0 : index
    %c0_41 = arith.constant 0 : index
    %c0_42 = arith.constant 0 : index
    %112 = vector.load %arg5[%c0_40, %c0_41, %c0_42] : memref<1x32x32xbf16, #tpu.memory_space<vmem>>, vector<1x32x32xbf16>
    %113 = vector.shape_cast %112 : vector<1x32x32xbf16> to vector<32x32xbf16>
    %cst_43 = arith.constant dense<0.000000e+00> : vector<16x32xf32>
    %114 = tpu.matmul %111, %113, %cst_43 {dimension_numbers = #tpu.dot_dimension_numbers<[1], [0], [0], [1], [0, 0, 1, 1], [], []>} : vector<16x32xbf16>, vector<32x32xbf16>, vector<16x32xf32> -> vector<16x32xf32>
    %c0_44 = arith.constant 0 : index
    %c3 = arith.constant 3 : index
    %c0_45 = arith.constant 0 : index
    %115 = vector.load %arg8[%c0_44, %c3, %c0_45] : memref<1x10x64xf32, #tpu.memory_space<vmem>>, vector<1x1x32xf32>
    %116 = vector.shape_cast %115 : vector<1x1x32xf32> to vector<1x32xf32>
    %117 = vector.broadcast %116 : vector<1x32xf32> to vector<16x32xf32>
    %118 = arith.addf %114, %117 : vector<16x32xf32>
    %119 = arith.addf %4, %118 : vector<16x32xf32>
    %cst_46 = arith.constant dense<0.000000e+00> : vector<16xf32>
    %120 = vector.multi_reduction <add>, %119, %cst_46 [1] : vector<16x32xf32> to vector<16xf32>
    %121 = vector.shape_cast %120 : vector<16xf32> to vector<16x1xf32>
    %cst_47 = arith.constant 3.200000e+01 : f32
    %122 = vector.broadcast %cst_47 : f32 to vector<16x1xf32>
    %123 = arith.divf %121, %122 : vector<16x1xf32>
    %124 = arith.mulf %119, %119 : vector<16x32xf32>
    %cst_48 = arith.constant dense<0.000000e+00> : vector<16xf32>
    %125 = vector.multi_reduction <add>, %124, %cst_48 [1] : vector<16x32xf32> to vector<16xf32>
    %126 = vector.shape_cast %125 : vector<16xf32> to vector<16x1xf32>
    %cst_49 = arith.constant 3.200000e+01 : f32
    %127 = vector.broadcast %cst_49 : f32 to vector<16x1xf32>
    %128 = arith.divf %126, %127 : vector<16x1xf32>
    %129 = arith.mulf %123, %123 : vector<16x1xf32>
    %130 = arith.subf %128, %129 : vector<16x1xf32>
    %131 = vector.broadcast %123 : vector<16x1xf32> to vector<16x32xf32>
    %132 = arith.subf %119, %131 : vector<16x32xf32>
    %cst_50 = arith.constant 9.99999974E-6 : f32
    %133 = vector.broadcast %cst_50 : f32 to vector<16x1xf32>
    %134 = arith.addf %130, %133 : vector<16x1xf32>
    %135 = math.rsqrt %134 : vector<16x1xf32>
    %136 = vector.broadcast %135 : vector<16x1xf32> to vector<16x32xf32>
    %137 = arith.mulf %132, %136 : vector<16x32xf32>
    %c0_51 = arith.constant 0 : index
    %c4 = arith.constant 4 : index
    %c0_52 = arith.constant 0 : index
    %138 = vector.load %arg8[%c0_51, %c4, %c0_52] : memref<1x10x64xf32, #tpu.memory_space<vmem>>, vector<1x1x32xf32>
    %139 = vector.shape_cast %138 : vector<1x1x32xf32> to vector<1x32xf32>
    %140 = vector.broadcast %139 : vector<1x32xf32> to vector<16x32xf32>
    %141 = arith.mulf %137, %140 : vector<16x32xf32>
    %c0_53 = arith.constant 0 : index
    %c5 = arith.constant 5 : index
    %c0_54 = arith.constant 0 : index
    %142 = vector.load %arg8[%c0_53, %c5, %c0_54] : memref<1x10x64xf32, #tpu.memory_space<vmem>>, vector<1x1x32xf32>
    %143 = vector.shape_cast %142 : vector<1x1x32xf32> to vector<1x32xf32>
    %144 = vector.broadcast %143 : vector<1x32xf32> to vector<16x32xf32>
    %145 = arith.addf %141, %144 : vector<16x32xf32>
    %146 = arith.truncf %145 : vector<16x32xf32> to vector<16x32xbf16>
    %c0_55 = arith.constant 0 : index
    %c0_56 = arith.constant 0 : index
    %c0_57 = arith.constant 0 : index
    %147 = vector.load %arg6[%c0_55, %c0_56, %c0_57] : memref<1x32x64xbf16, #tpu.memory_space<vmem>>, vector<1x32x64xbf16>
    %148 = vector.shape_cast %147 : vector<1x32x64xbf16> to vector<32x64xbf16>
    %cst_58 = arith.constant dense<0.000000e+00> : vector<16x64xf32>
    %149 = tpu.matmul %146, %148, %cst_58 {dimension_numbers = #tpu.dot_dimension_numbers<[1], [0], [0], [1], [0, 0, 1, 1], [], []>} : vector<16x32xbf16>, vector<32x64xbf16>, vector<16x64xf32> -> vector<16x64xf32>
    %c0_59 = arith.constant 0 : index
    %c6 = arith.constant 6 : index
    %c0_60 = arith.constant 0 : index
    %150 = vector.load %arg8[%c0_59, %c6, %c0_60] : memref<1x10x64xf32, #tpu.memory_space<vmem>>, vector<1x1x64xf32>
    %151 = vector.shape_cast %150 : vector<1x1x64xf32> to vector<1x64xf32>
    %152 = vector.broadcast %151 : vector<1x64xf32> to vector<16x64xf32>
    %153 = arith.addf %149, %152 : vector<16x64xf32>
    %cst_61 = arith.constant 0.000000e+00 : f32
    %154 = vector.broadcast %cst_61 : f32 to vector<16x64xf32>
    %155 = arith.maximumf %153, %154 : vector<16x64xf32>
    %156 = arith.truncf %155 : vector<16x64xf32> to vector<16x64xbf16>
    %c0_62 = arith.constant 0 : index
    %c0_63 = arith.constant 0 : index
    %c0_64 = arith.constant 0 : index
    %157 = vector.load %arg7[%c0_62, %c0_63, %c0_64] : memref<1x64x32xbf16, #tpu.memory_space<vmem>>, vector<1x64x32xbf16>
    %158 = vector.shape_cast %157 : vector<1x64x32xbf16> to vector<64x32xbf16>
    %cst_65 = arith.constant dense<0.000000e+00> : vector<16x32xf32>
    %159 = tpu.matmul %156, %158, %cst_65 {dimension_numbers = #tpu.dot_dimension_numbers<[1], [0], [0], [1], [0, 0, 1, 1], [], []>} : vector<16x64xbf16>, vector<64x32xbf16>, vector<16x32xf32> -> vector<16x32xf32>
    %c0_66 = arith.constant 0 : index
    %c7 = arith.constant 7 : index
    %c0_67 = arith.constant 0 : index
    %160 = vector.load %arg8[%c0_66, %c7, %c0_67] : memref<1x10x64xf32, #tpu.memory_space<vmem>>, vector<1x1x32xf32>
    %161 = vector.shape_cast %160 : vector<1x1x32xf32> to vector<1x32xf32>
    %162 = vector.broadcast %161 : vector<1x32xf32> to vector<16x32xf32>
    %163 = arith.addf %159, %162 : vector<16x32xf32>
    %164 = arith.addf %145, %163 : vector<16x32xf32>
    %cst_68 = arith.constant dense<0.000000e+00> : vector<16xf32>
    %165 = vector.multi_reduction <add>, %164, %cst_68 [1] : vector<16x32xf32> to vector<16xf32>
    %166 = vector.shape_cast %165 : vector<16xf32> to vector<16x1xf32>
    %cst_69 = arith.constant 3.200000e+01 : f32
    %167 = vector.broadcast %cst_69 : f32 to vector<16x1xf32>
    %168 = arith.divf %166, %167 : vector<16x1xf32>
    %169 = arith.mulf %164, %164 : vector<16x32xf32>
    %cst_70 = arith.constant dense<0.000000e+00> : vector<16xf32>
    %170 = vector.multi_reduction <add>, %169, %cst_70 [1] : vector<16x32xf32> to vector<16xf32>
    %171 = vector.shape_cast %170 : vector<16xf32> to vector<16x1xf32>
    %cst_71 = arith.constant 3.200000e+01 : f32
    %172 = vector.broadcast %cst_71 : f32 to vector<16x1xf32>
    %173 = arith.divf %171, %172 : vector<16x1xf32>
    %174 = arith.mulf %168, %168 : vector<16x1xf32>
    %175 = arith.subf %173, %174 : vector<16x1xf32>
    %176 = vector.broadcast %168 : vector<16x1xf32> to vector<16x32xf32>
    %177 = arith.subf %164, %176 : vector<16x32xf32>
    %cst_72 = arith.constant 9.99999974E-6 : f32
    %178 = vector.broadcast %cst_72 : f32 to vector<16x1xf32>
    %179 = arith.addf %175, %178 : vector<16x1xf32>
    %180 = math.rsqrt %179 : vector<16x1xf32>
    %181 = vector.broadcast %180 : vector<16x1xf32> to vector<16x32xf32>
    %182 = arith.mulf %177, %181 : vector<16x32xf32>
    %c0_73 = arith.constant 0 : index
    %c8_74 = arith.constant 8 : index
    %c0_75 = arith.constant 0 : index
    %183 = vector.load %arg8[%c0_73, %c8_74, %c0_75] : memref<1x10x64xf32, #tpu.memory_space<vmem>>, vector<1x1x32xf32>
    %184 = vector.shape_cast %183 : vector<1x1x32xf32> to vector<1x32xf32>
    %185 = vector.broadcast %184 : vector<1x32xf32> to vector<16x32xf32>
    %186 = arith.mulf %182, %185 : vector<16x32xf32>
    %c0_76 = arith.constant 0 : index
    %c9 = arith.constant 9 : index
    %c0_77 = arith.constant 0 : index
    %187 = vector.load %arg8[%c0_76, %c9, %c0_77] : memref<1x10x64xf32, #tpu.memory_space<vmem>>, vector<1x1x32xf32>
    %188 = vector.shape_cast %187 : vector<1x1x32xf32> to vector<1x32xf32>
    %189 = vector.broadcast %188 : vector<1x32xf32> to vector<16x32xf32>
    %190 = arith.addf %186, %189 : vector<16x32xf32>
    %191 = vector.shape_cast %190 : vector<16x32xf32> to vector<2x8x32xf32>
    %c0_78 = arith.constant 0 : index
    %c0_79 = arith.constant 0 : index
    %c0_80 = arith.constant 0 : index
    %192 = vector.load %arg9[%c0_78, %c0_79, %c0_80] : memref<2x8x32xf32, #tpu.memory_space<vmem>>, vector<2x8x32xf32>
    tpu.vector_store %arg9[%c0_78, %c0_79, %c0_80], %191 {strides = array<i32>} : memref<2x8x32xf32, #tpu.memory_space<vmem>>, vector<2x8x32xf32>,
    return
  }
  func.func @transform_0(%arg0: i32, %arg1: i32) -> (i32, i32, i32) {
    %c0_i32 = arith.constant 0 : i32
    %c0_i32_0 = arith.constant 0 : i32
    %c0_i32_1 = arith.constant 0 : i32
    return %arg0, %c0_i32, %c0_i32_0 : i32, i32, i32
  }
  func.func @transform_1(%arg0: i32, %arg1: i32) -> (i32, i32) {
    %c0_i32 = arith.constant 0 : i32
    %c0_i32_0 = arith.constant 0 : i32
    %c0_i32_1 = arith.constant 0 : i32
    return %c0_i32, %c0_i32_0 : i32, i32
  }
  func.func @transform_2(%arg0: i32, %arg1: i32) -> (i32, i32, i32) {
    %c0_i32 = arith.constant 0 : i32
    %c0_i32_0 = arith.constant 0 : i32
    %c0_i32_1 = arith.constant 0 : i32
    return %arg1, %c0_i32, %c0_i32_0 : i32, i32, i32
  }
  func.func @transform_3(%arg0: i32, %arg1: i32) -> (i32, i32, i32) {
    %c0_i32 = arith.constant 0 : i32
    %c0_i32_0 = arith.constant 0 : i32
    %c0_i32_1 = arith.constant 0 : i32
    return %arg1, %c0_i32, %c0_i32_0 : i32, i32, i32
  }
  func.func @transform_4(%arg0: i32, %arg1: i32) -> (i32, i32, i32) {
    %c0_i32 = arith.constant 0 : i32
    %c0_i32_0 = arith.constant 0 : i32
    %c0_i32_1 = arith.constant 0 : i32
    return %arg1, %c0_i32, %c0_i32_0 : i32, i32, i32
  }
  func.func @transform_5(%arg0: i32, %arg1: i32) -> (i32, i32, i32) {
    %c0_i32 = arith.constant 0 : i32
    %c0_i32_0 = arith.constant 0 : i32
    %c0_i32_1 = arith.constant 0 : i32
    return %arg1, %c0_i32, %c0_i32_0 : i32, i32, i32
  }
  func.func @transform_6(%arg0: i32, %arg1: i32) -> (i32, i32, i32) {
    %c0_i32 = arith.constant 0 : i32
    %c0_i32_0 = arith.constant 0 : i32
    %c0_i32_1 = arith.constant 0 : i32
    return %arg1, %c0_i32, %c0_i32_0 : i32, i32, i32
  }
  func.func @transform_7(%arg0: i32, %arg1: i32) -> (i32, i32, i32) {
    %c0_i32 = arith.constant 0 : i32
    %c0_i32_0 = arith.constant 0 : i32
    %c0_i32_1 = arith.constant 0 : i32
    return %arg0, %c0_i32, %c0_i32_0 : i32, i32, i32
  }
}

</mosaic_0001>

<llo_original>
// kernel: tpu_custom_call.1
$region0: #{tpu_custom_call.1}
  #allocation0 [shape = 'u32[]', space=smem, size = 0x4, offset = 0x4, fixed_abs, tag = 'smem constant byte address 0x4 - core index']
  #allocation1 [shape = 'u32[144,128]{1,0:T(1,128)}', space=vmem, size = 0x12000, scoped, tag = 'internal scratch']
  #allocation2 [shape = 'f32[16,32]{1,0:T(8,128)}', space=vmem, size = 0x2000, scoped, tag = 'scratch operand']
  %s0 = inlined_call_operand.vmem [shape: f32[2,8,32], index: 0, kind: input, shape index: {}]
  %s1 = inlined_call_operand.hbm [shape: f32[8,32], index: 1, kind: input, shape index: {}]
  %s2 = inlined_call_operand.vmem [shape: bf16[2,32,96], index: 2, kind: input, shape index: {}]
  %s3 = inlined_call_operand.vmem [shape: bf16[2,32,32], index: 3, kind: input, shape index: {}]
  %s4 = inlined_call_operand.vmem [shape: bf16[2,32,64], index: 4, kind: input, shape index: {}]
  %s5 = inlined_call_operand.vmem [shape: bf16[2,64,32], index: 5, kind: input, shape index: {}]
  %s6 = inlined_call_operand.vmem [shape: f32[2,10,64], index: 6, kind: input, shape index: {}]
  %s7 = inlined_call_operand.hbm [shape: f32[2,8,32], index: 7, kind: output, shape index: {}]
  %s8 = sld [smem:[#allocation0]]
  $region69: #{tpu_custom_call.1} parent=0
    _
  %s10 = ssub.s32 1, %s8
  %s11 = scalar_select 0, %s10, %s8
  $region1: #{tpu_custom_call.1} parent=0
    #allocation3 [shape = 'u8[4096]{0}', space=vmem, size = 0x1000, scoped, tag = 'input window, operand 1, single buffered']
    #allocation4 [shape = 's32[2]{0}', space=sflag, size = 0x8, scoped, tag = 'scoped memory for tpu_custom_call.1']
    #allocation5 [shape = 's32[2]{0}', space=sflag, size = 0x8, scoped, tag = 'scoped memory for tpu_custom_call.1']
    #allocation6 [shape = 'u8[8192]{0}', space=vmem, size = 0x2000, scoped, tag = 'output window, operand 0, single buffered']
    %12 = vsyncpa [#allocation4], 0
    %13 = vsyncpa [#allocation5], 0
    loop: start=0, step=1, limit=4
    $region2: #{tpu_custom_call.1} parent=1 // loop_pre_header
      _
    $region3: #{tpu_custom_call.1} parent=1 // loop_header
      %s15 = sphi 0, %s19
      %p16 = scmp.ge.s32.totalorder %s15, 4
      %s22 = sphi 0, %s34
      %s23 = sphi 0, %s30
      %s24 = sphi 0, %s22
      %s25 = sphi 0, %s23
      %s26 = sphi 0, %s24
      %s27 = sphi 0, %s25
      %s37 = sphi 0, %s39
      %s40 = sphi 0, %s37
      %s41 = sphi 0, %s40
      %s57 = sphi 0, %s41
      %s61 = sphi 0, %s61
      %s63 = sphi 0, %s61
      %s64 = sphi 0, %s63
      %s78 = sphi 0, %s64
      %s84 = sphi 0, %s86
      %s87 = sphi 0, %s84
      %s88 = sphi 0, %s87
      %s104 = sphi 0, %s88
      %s110 = sphi 0, %s112
      %s113 = sphi 0, %s110
      %s114 = sphi 0, %s113
      %s130 = sphi 0, %s114
      %s136 = sphi 0, %s138
      %s139 = sphi 0, %s136
      %s140 = sphi 0, %s139
      %s156 = sphi 0, %s140
      %s162 = sphi 0, %s164
      %s165 = sphi 0, %s162
      %s166 = sphi 0, %s165
      %s182 = sphi 0, %s166
      %s188 = sphi 0, %s190
      %s191 = sphi 0, %s188
      %s192 = sphi 0, %s191
      %s208 = sphi 0, %s192
      %s214 = sphi 0, %s216
      %s217 = sphi 0, %s214
      %s218 = sphi 0, %s217
      %s234 = sphi 0, %s218
    $region4: #{tpu_custom_call.1} parent=1 // loop_header_branch
      %18 = sbr.rel (%p16) target = $region8
    $region5: #{tpu_custom_call.1} parent=1 // loop_body
      %s20 = ssub.s32 %s15, 1
      %s21 = ssub.s32 %s15, 2
      %s28 = sadd.s32 1, %s23
      %p29 = scmp.ge.s32.totalorder %s28, 2
      %s30 = scalar_select %p29, 0, %s28
      %s31 = sadd.s32 1, %s22
      %s32 = scalar_select %p29, %s31, %s22
      %p33 = scmp.ge.s32.totalorder %s32, 1
      %s34 = scalar_select %p33, 0, %s32
      %s35 = ssub.s32 %s22, %s34
      %p36 = scmp.eq.s32.totalorder %s35, 0
      %s38 = sadd.s32 %s37, 1
      %s39 = scalar_select %p36, %s37, %s38
      %p42 = pneg %p36
      %p43 = scmp.eq.s32.totalorder %s15, 1
      %p44 = por %p42, %p43
      %p45 = scmp.ne.s32.totalorder %s37, %s40
      %p46 = scmp.eq.s32.totalorder %s15, 0
      %p47 = por %p45, %p46
      %p48 = scmp.ne.s32.totalorder %s37, %s40
      %p49 = scmp.eq.s32.totalorder %s20, 1
      %p50 = por %p48, %p49
      %p51 = scmp.ne.s32.totalorder %s40, %s41
      %p52 = scmp.eq.s32.totalorder %s20, 0
      %p53 = por %p51, %p52
      %p54 = scmp.ne.s32.totalorder %s40, %s41
      %p55 = scmp.eq.s32.totalorder %s21, 1
      %p56 = por %p54, %p55
      %p58 = scmp.ne.s32.totalorder %s41, %s57
      %p59 = scmp.eq.s32.totalorder %s21, 0
      %p60 = por %p58, %p59
      %s62 = sadd.s32 %s61, 1
      %p65 = scmp.eq.s32.totalorder %s15, 1
      %p66 = scmp.ne.s32.totalorder %s61, %s63
      %p67 = scmp.eq.s32.totalorder %s15, 0
      %p68 = por %p66, %p67
      %p69 = scmp.ne.s32.totalorder %s61, %s63
      %p70 = scmp.eq.s32.totalorder %s20, 1
      %p71 = por %p69, %p70
      %p72 = scmp.ne.s32.totalorder %s63, %s64
      %p73 = scmp.eq.s32.totalorder %s20, 0
      %p74 = por %p72, %p73
      %p75 = scmp.ne.s32.totalorder %s63, %s64
      %p76 = scmp.eq.s32.totalorder %s21, 1
      %p77 = por %p75, %p76
      %p79 = scmp.ne.s32.totalorder %s64, %s78
      %p80 = scmp.eq.s32.totalorder %s21, 0
      %p81 = por %p79, %p80
      %s82 = ssub.s32 %s23, %s30
      %p83 = scmp.eq.s32.totalorder %s82, 0
      %s85 = sadd.s32 %s84, 1
      %s86 = scalar_select %p83, %s84, %s85
      %p89 = pneg %p83
      %p90 = scmp.eq.s32.totalorder %s15, 1
      %p91 = por %p89, %p90
      %p92 = scmp.ne.s32.totalorder %s84, %s87
      %p93 = scmp.eq.s32.totalorder %s15, 0
      %p94 = por %p92, %p93
      %p95 = scmp.ne.s32.totalorder %s84, %s87
      %p96 = scmp.eq.s32.totalorder %s20, 1
      %p97 = por %p95, %p96
      %p98 = scmp.ne.s32.totalorder %s87, %s88
      %p99 = scmp.eq.s32.totalorder %s20, 0
      %p100 = por %p98, %p99
      %p101 = scmp.ne.s32.totalorder %s87, %s88
      %p102 = scmp.eq.s32.totalorder %s21, 1
      %p103 = por %p101, %p102
      %p105 = scmp.ne.s32.totalorder %s88, %s104
      %p106 = scmp.eq.s32.totalorder %s21, 0
      %p107 = por %p105, %p106
      %s108 = ssub.s32 %s23, %s30
      %p109 = scmp.eq.s32.totalorder %s108, 0
      %s111 = sadd.s32 %s110, 1
      %s112 = scalar_select %p109, %s110, %s111
      %p115 = pneg %p109
      %p116 = scmp.eq.s32.totalorder %s15, 1
      %p117 = por %p115, %p116
      %p118 = scmp.ne.s32.totalorder %s110, %s113
      %p119 = scmp.eq.s32.totalorder %s15, 0
      %p120 = por %p118, %p119
      %p121 = scmp.ne.s32.totalorder %s110, %s113
      %p122 = scmp.eq.s32.totalorder %s20, 1
      %p123 = por %p121, %p122
      %p124 = scmp.ne.s32.totalorder %s113, %s114
      %p125 = scmp.eq.s32.totalorder %s20, 0
      %p126 = por %p124, %p125
      %p127 = scmp.ne.s32.totalorder %s113, %s114
      %p128 = scmp.eq.s32.totalorder %s21, 1
      %p129 = por %p127, %p128
      %p131 = scmp.ne.s32.totalorder %s114, %s130
      %p132 = scmp.eq.s32.totalorder %s21, 0
      %p133 = por %p131, %p132
      %s134 = ssub.s32 %s23, %s30
      %p135 = scmp.eq.s32.totalorder %s134, 0
      %s137 = sadd.s32 %s136, 1
      %s138 = scalar_select %p135, %s136, %s137
      %p141 = pneg %p135
      %p142 = scmp.eq.s32.totalorder %s15, 1
      %p143 = por %p141, %p142
      %p144 = scmp.ne.s32.totalorder %s136, %s139
      %p145 = scmp.eq.s32.totalorder %s15, 0
      %p146 = por %p144, %p145
      %p147 = scmp.ne.s32.totalorder %s136, %s139
      %p148 = scmp.eq.s32.totalorder %s20, 1
      %p149 = por %p147, %p148
      %p150 = scmp.ne.s32.totalorder %s139, %s140
      %p151 = scmp.eq.s32.totalorder %s20, 0
      %p152 = por %p150, %p151
      %p153 = scmp.ne.s32.totalorder %s139, %s140
      %p154 = scmp.eq.s32.totalorder %s21, 1
      %p155 = por %p153, %p154
      %p157 = scmp.ne.s32.totalorder %s140, %s156
      %p158 = scmp.eq.s32.totalorder %s21, 0
      %p159 = por %p157, %p158
      %s160 = ssub.s32 %s23, %s30
      %p161 = scmp.eq.s32.totalorder %s160, 0
      %s163 = sadd.s32 %s162, 1
      %s164 = scalar_select %p161, %s162, %s163
      %p167 = pneg %p161
      %p168 = scmp.eq.s32.totalorder %s15, 1
      %p169 = por %p167, %p168
      %p170 = scmp.ne.s32.totalorder %s162, %s165
      %p171 = scmp.eq.s32.totalorder %s15, 0
      %p172 = por %p170, %p171
      %p173 = scmp.ne.s32.totalorder %s162, %s165
      %p174 = scmp.eq.s32.totalorder %s20, 1
      %p175 = por %p173, %p174
      %p176 = scmp.ne.s32.totalorder %s165, %s166
      %p177 = scmp.eq.s32.totalorder %s20, 0
      %p178 = por %p176, %p177
      %p179 = scmp.ne.s32.totalorder %s165, %s166
      %p180 = scmp.eq.s32.totalorder %s21, 1
      %p181 = por %p179, %p180
      %p183 = scmp.ne.s32.totalorder %s166, %s182
      %p184 = scmp.eq.s32.totalorder %s21, 0
      %p185 = por %p183, %p184
      %s186 = ssub.s32 %s23, %s30
      %p187 = scmp.eq.s32.totalorder %s186, 0
      %s189 = sadd.s32 %s188, 1
      %s190 = scalar_select %p187, %s188, %s189
      %p193 = pneg %p187
      %p194 = scmp.eq.s32.totalorder %s15, 1
      %p195 = por %p193, %p194
      %p196 = scmp.ne.s32.totalorder %s188, %s191
      %p197 = scmp.eq.s32.totalorder %s15, 0
      %p198 = por %p196, %p197
      %p199 = scmp.ne.s32.totalorder %s188, %s191
      %p200 = scmp.eq.s32.totalorder %s20, 1
      %p201 = por %p199, %p200
      %p202 = scmp.ne.s32.totalorder %s191, %s192
      %p203 = scmp.eq.s32.totalorder %s20, 0
      %p204 = por %p202, %p203
      %p205 = scmp.ne.s32.totalorder %s191, %s192
      %p206 = scmp.eq.s32.totalorder %s21, 1
      %p207 = por %p205, %p206
      %p209 = scmp.ne.s32.totalorder %s192, %s208
      %p210 = scmp.eq.s32.totalorder %s21, 0
      %p211 = por %p209, %p210
      %s212 = ssub.s32 %s22, %s34
      %p213 = scmp.eq.s32.totalorder %s212, 0
      %s215 = sadd.s32 %s214, 1
      %s216 = scalar_select %p213, %s214, %s215
      %p219 = pneg %p213
      %p220 = scmp.eq.s32.totalorder %s15, 1
      %p221 = por %p219, %p220
      %p222 = scmp.ne.s32.totalorder %s214, %s217
      %p223 = scmp.eq.s32.totalorder %s15, 0
      %p224 = por %p222, %p223
      %p225 = scmp.ne.s32.totalorder %s214, %s217
      %p226 = scmp.eq.s32.totalorder %s20, 1
      %p227 = por %p225, %p226
      %p228 = scmp.ne.s32.totalorder %s217, %s218
      %p229 = scmp.eq.s32.totalorder %s20, 0
      %p230 = por %p228, %p229
      %p231 = scmp.ne.s32.totalorder %s217, %s218
      %p232 = scmp.eq.s32.totalorder %s21, 1
      %p233 = por %p231, %p232
      %p235 = scmp.ne.s32.totalorder %s218, %s234
      %p236 = scmp.eq.s32.totalorder %s21, 0
      %p237 = por %p235, %p236
      %p238 = scmp.le.s32.totalorder 1, %s15
      %p239 = scmp.lt.s32.totalorder %s15, 3
      %p240 = pnand %p238, %p239
      %p241 = pneg %p240
      // Predicated region
      $region9: #{tpu_custom_call.1} parent=5 // pred_check
        _
      $region10: #{tpu_custom_call.1} parent=5 // pred_check_branch
        %243 = sbr.rel (%p240) target = $region12
      $region11: #{tpu_custom_call.1} parent=5 // pred_region
        %s244 = ssub.s32 %s15, 1
        // Predicated region
        $region13: #{tpu_custom_call.1} parent=11 // pred_check
          %p245 = pneg %p53
        $region14: #{tpu_custom_call.1} parent=11 // pred_check_branch
          %247 = sbr.rel (%p245) target = $region16
        $region15: #{tpu_custom_call.1} parent=11 // pred_region
          %s248 = smul.u32 2, %s24
          %p249 = scmp.lt.s32.totalorder %s248, 1
          %s250 = scalar_select %p249, %s248, 1
          %s251 = smul.addr %s250, 8
          %s252 = scalar_lea.vmem %s0, %s251
          %s253 = smul.u32 2, %s24
        $region16: #{tpu_custom_call.1} parent=11 // pred_fallthru
          _
        // Predicated region
        $region17: #{tpu_custom_call.1} parent=11 // pred_check
          %p254 = pneg %p74
        $region18: #{tpu_custom_call.1} parent=11 // pred_check_branch
          %256 = sbr.rel (%p254) target = $region20
        $region19: #{tpu_custom_call.1} parent=11 // pred_region
          %s258 = ssub.s32 128, 128
          %259 = vsyncadd [#allocation4], %s258
          %s261 = sshll.u32 [#allocation3], 4
          %s262 = int_to_ptr.vmem [resolvable:$true] %s261
          %264 = dma.hbm_to_vmem [thread:$0]  %s1, 128, %s262, [#allocation4]
        $region20: #{tpu_custom_call.1} parent=11 // pred_fallthru
          _
      $region12: #{tpu_custom_call.1} parent=5 // pred_fallthru
        _
      %p265 = scmp.lt.s32.totalorder %s15, 2
      // Predicated region
      $region21: #{tpu_custom_call.1} parent=5 // pred_check
        %p266 = pneg %p265
      $region22: #{tpu_custom_call.1} parent=5 // pred_check_branch
        %268 = sbr.rel (%p266) target = $region24
      $region23: #{tpu_custom_call.1} parent=5 // pred_region
        // Predicated region
        $region25: #{tpu_custom_call.1} parent=23 // pred_check
          %p269 = pneg %p94
        $region26: #{tpu_custom_call.1} parent=23 // pred_check_branch
          %271 = sbr.rel (%p269) target = $region28
        $region27: #{tpu_custom_call.1} parent=23 // pred_region
          %p272 = scmp.lt.s32.totalorder %s23, 1
          %s273 = scalar_select %p272, %s23, 1
          %s274 = smul.addr %s273, 4
          %s275 = smul.addr %s274, 4
          %s276 = scalar_lea.vmem %s2, %s275
        $region28: #{tpu_custom_call.1} parent=23 // pred_fallthru
          _
        // Predicated region
        $region29: #{tpu_custom_call.1} parent=23 // pred_check
          %p277 = pneg %p120
        $region30: #{tpu_custom_call.1} parent=23 // pred_check_branch
          %279 = sbr.rel (%p277) target = $region32
        $region31: #{tpu_custom_call.1} parent=23 // pred_region
          %p280 = scmp.lt.s32.totalorder %s23, 1
          %s281 = scalar_select %p280, %s23, 1
          %s282 = smul.addr %s281, 4
          %s283 = smul.addr %s282, 4
          %s284 = scalar_lea.vmem %s3, %s283
        $region32: #{tpu_custom_call.1} parent=23 // pred_fallthru
          _
        // Predicated region
        $region33: #{tpu_custom_call.1} parent=23 // pred_check
          %p285 = pneg %p146
        $region34: #{tpu_custom_call.1} parent=23 // pred_check_branch
          %287 = sbr.rel (%p285) target = $region36
        $region35: #{tpu_custom_call.1} parent=23 // pred_region
          %p288 = scmp.lt.s32.totalorder %s23, 1
          %s289 = scalar_select %p288, %s23, 1
          %s290 = smul.addr %s289, 4
          %s291 = smul.addr %s290, 4
          %s292 = scalar_lea.vmem %s4, %s291
        $region36: #{tpu_custom_call.1} parent=23 // pred_fallthru
          _
        // Predicated region
        $region37: #{tpu_custom_call.1} parent=23 // pred_check
          %p293 = pneg %p172
        $region38: #{tpu_custom_call.1} parent=23 // pred_check_branch
          %295 = sbr.rel (%p293) target = $region40
        $region39: #{tpu_custom_call.1} parent=23 // pred_region
          %p296 = scmp.lt.s32.totalorder %s23, 1
          %s297 = scalar_select %p296, %s23, 1
          %s298 = smul.addr %s297, 8
          %s299 = smul.addr %s298, 4
          %s300 = scalar_lea.vmem %s5, %s299
        $region40: #{tpu_custom_call.1} parent=23 // pred_fallthru
          _
        // Predicated region
        $region41: #{tpu_custom_call.1} parent=23 // pred_check
          %p301 = pneg %p198
        $region42: #{tpu_custom_call.1} parent=23 // pred_check_branch
          %303 = sbr.rel (%p301) target = $region44
        $region43: #{tpu_custom_call.1} parent=23 // pred_region
          %p304 = scmp.lt.s32.totalorder %s23, 1
          %s305 = scalar_select %p304, %s23, 1
          %s306 = smul.addr %s305, 2
          %s307 = smul.addr %s306, 8
          %s308 = scalar_lea.vmem %s6, %s307
        $region44: #{tpu_custom_call.1} parent=23 // pred_fallthru
          _
      $region24: #{tpu_custom_call.1} parent=5 // pred_fallthru
        _
      %p309 = scmp.le.s32.totalorder 1, %s15
      %p310 = scmp.lt.s32.totalorder %s15, 3
      %p311 = pnand %p309, %p310
      %p312 = pneg %p311
      // Predicated region
      $region45: #{tpu_custom_call.1} parent=5 // pred_check
        _
      $region46: #{tpu_custom_call.1} parent=5 // pred_check_branch
        %314 = sbr.rel (%p311) target = $region48
      $region47: #{tpu_custom_call.1} parent=5 // pred_region
        %s315 = ssub.s32 %s15, 1
        // Predicated region
        $region49: #{tpu_custom_call.1} parent=47 // pred_check
          %p316 = pneg %p74
        $region50: #{tpu_custom_call.1} parent=47 // pred_check_branch
          %318 = sbr.rel (%p316) target = $region52
        $region51: #{tpu_custom_call.1} parent=47 // pred_region
          %319 = dma.done [#allocation4], 128
        $region52: #{tpu_custom_call.1} parent=47 // pred_fallthru
          _
        %s320 = smul.u32 2, %s24
        %p321 = scmp.lt.s32.totalorder %s320, 1
        %s322 = scalar_select %p321, %s320, 1
        %s323 = smul.addr %s322, 8
        %s324 = scalar_lea.vmem %s0, %s323
        %p325 = pneg %p53
        %p326 = pneg %p50
        %p327 = pneg %p74
        %p328 = pneg %p71
        %p329 = scmp.lt.s32.totalorder %s25, 1
        %s330 = scalar_select %p329, %s25, 1
        %s331 = smul.addr %s330, 4
        %s332 = smul.addr %s331, 4
        %s333 = scalar_lea.vmem %s2, %s332
        %p334 = pneg %p100
        %p335 = pneg %p97
        %p336 = scmp.lt.s32.totalorder %s25, 1
        %s337 = scalar_select %p336, %s25, 1
        %s338 = smul.addr %s337, 4
        %s339 = smul.addr %s338, 4
        %s340 = scalar_lea.vmem %s3, %s339
        %p341 = pneg %p126
        %p342 = pneg %p123
        %p343 = scmp.lt.s32.totalorder %s25, 1
        %s344 = scalar_select %p343, %s25, 1
        %s345 = smul.addr %s344, 4
        %s346 = smul.addr %s345, 4
        %s347 = scalar_lea.vmem %s4, %s346
        %p348 = pneg %p152
        %p349 = pneg %p149
        %p350 = scmp.lt.s32.totalorder %s25, 1
        %s351 = scalar_select %p350, %s25, 1
        %s352 = smul.addr %s351, 8
        %s353 = smul.addr %s352, 4
        %s354 = scalar_lea.vmem %s5, %s353
        %p355 = pneg %p178
        %p356 = pneg %p175
        %p357 = scmp.lt.s32.totalorder %s25, 1
        %s358 = scalar_select %p357, %s25, 1
        %s359 = smul.addr %s358, 2
        %s360 = smul.addr %s359, 8
        %s361 = scalar_lea.vmem %s6, %s360
        %p362 = pneg %p204
        %p363 = pneg %p201
        %p364 = pneg %p230
        %p365 = pneg %p227
        %s366 = smul.u32 2, %s24
        %p367 = scmp.lt.s32.totalorder %s366, 1
        %s368 = scalar_select %p367, %s366, 1
        %s369 = smul.addr %s368, 8
        %s370 = scalar_lea.vmem %s0, %s369
        %s371 = smul.u32 2, %s24
        %p372 = scmp.lt.s32.totalorder %s25, 1
        %s373 = scalar_select %p372, %s25, 1
        %s374 = smul.addr %s373, 4
        %s375 = smul.addr %s374, 4
        %s376 = scalar_lea.vmem %s2, %s375
        %p377 = scmp.lt.s32.totalorder %s25, 1
        %s378 = scalar_select %p377, %s25, 1
        %s379 = smul.addr %s378, 4
        %s380 = smul.addr %s379, 4
        %s381 = scalar_lea.vmem %s3, %s380
        %p382 = scmp.lt.s32.totalorder %s25, 1
        %s383 = scalar_select %p382, %s25, 1
        %s384 = smul.addr %s383, 4
        %s385 = smul.addr %s384, 4
        %s386 = scalar_lea.vmem %s4, %s385
        %p387 = scmp.lt.s32.totalorder %s25, 1
        %s388 = scalar_select %p387, %s25, 1
        %s389 = smul.addr %s388, 8
        %s390 = smul.addr %s389, 4
        %s391 = scalar_lea.vmem %s5, %s390
        %p392 = scmp.lt.s32.totalorder %s25, 1
        %s393 = scalar_select %p392, %s25, 1
        %s394 = smul.addr %s393, 2
        %s395 = smul.addr %s394, 8
        %s396 = scalar_lea.vmem %s6, %s395
        %s397 = smul.u32 2, %s24
        %p399 = scmp.eq.s32.totalorder %s25, 0
        // Predicated region
        $region53: #{tpu_custom_call.1} parent=47 // pred_check
          %p400 = pneg %p399
        $region54: #{tpu_custom_call.1} parent=47 // pred_check_branch
          %402 = sbr.rel (%p400) target = $region56
        $region55: #{tpu_custom_call.1} parent=47 // pred_region
          %v403 = vld [vmem:[%s370] sm:$0xff]
          %v404 = vld [vmem:[%s370 + $0x8] sm:$0xff]
          %v405 = vld [vmem:[#allocation3] sm:$0xff]
          %v406 = vadd.f32 %v403, %v405
          %v407 = vadd.f32 %v404, %v405
          %vm408 = vcmask 261120
          %409 = vst.msk [vmem:[#allocation6] sm:$0xff] %vm408, %v406
          %410 = vst.msk [vmem:[#allocation6 + $0x8] sm:$0xff] %vm408, %v407
        $region56: #{tpu_custom_call.1} parent=47 // pred_fallthru
          _
        %v411 = vld [vmem:[#allocation6] sm:$0xff]
        %v412 = vld [vmem:[#allocation6 + $0x8] sm:$0xff]
        %v413 = vpack.c.bf16 %v412, %v411
        %v414 = vld [vmem:[%s376] sm:$0xf]
        %v415 = vld [vmem:[%s376 + $0x4] sm:$0xf]
        %v416 = vld [vmem:[%s376 + $0x8] sm:$0xf]
        %v417 = vld [vmem:[%s376 + $0xc] sm:$0xf]
        %v422 = vunpack.c.l.b16 %v414
        %v423 = vunpack.c.l.b16 %v415
        %v424 = vunpack.c.l.b16 %v416
        %v425 = vunpack.c.l.b16 %v417
        %v426 = vpack.c.b16 %v423, %v422
        %v427 = vpack.c.b16 %v425, %v424
        %vm430 = vcmask 261120
        %v432 = vsel %vm430, %v413, 0
        %434 = vmatprep.subr.bf16.mxu0 0
        %435 = vmatpush1.bf16.msra.mxu0 %v426
        %436 = vmatprep.subr.bf16.mxu0 0
        %437 = vmatpush1.bf16.msra.mxu0 %v427
        %438 = vmatprep.subr.bf16.mxu0 0
        %439 = vmatpush1.bf16.msra.mxu0 0
        %440 = vmatprep.subr.bf16.mxu0 0
        %441 = vmatpush1.bf16.msra.mxu0 0
        %442 = vmatprep.subr.bf16.mxu0 0
        %443 = vmatpush1.bf16.msra.mxu0 0
        %444 = vmatprep.subr.bf16.mxu0 0
        %445 = vmatpush1.bf16.msra.mxu0 0
        %446 = vmatprep.subr.bf16.mxu0 0
        %447 = vmatpush1.bf16.msra.mxu0 0
        %448 = vmatprep.subr.bf16.mxu0 0
        %449 = vmatpush1.bf16.msra.mxu0 0
        %450 = vmatprep.subr.bf16.mxu0 0
        %451 = vmatpush1.bf16.msra.mxu0 0
        %452 = vmatprep.subr.bf16.mxu0 0
        %453 = vmatpush1.bf16.msra.mxu0 0
        %454 = vmatprep.subr.bf16.mxu0 0
        %455 = vmatpush1.bf16.msra.mxu0 0
        %456 = vmatprep.subr.bf16.mxu0 0
        %457 = vmatpush1.bf16.msra.mxu0 0
        %458 = vmatprep.subr.bf16.mxu0 0
        %459 = vmatpush1.bf16.msra.mxu0 0
        %460 = vmatprep.subr.bf16.mxu0 0
        %461 = vmatpush1.bf16.msra.mxu0 0
        %462 = vmatprep.subr.bf16.mxu0 0
        %463 = vmatpush1.bf16.msra.mxu0 0
        %464 = vmatprep.subr.bf16.mxu0 0
        %465 = vmatpush1.bf16.msra.mxu0 0
        %466 = vmatprep.mubr.bf16.mxu0 0
        %467 = vmatmul.mubr.bf16.gmra.mrb[0].mxu0 %v432
        %v468 = vpop.f32.mrb[0].mxu0
        %v469 = vadd.f32 0.0, %v468
        %v470 = vpop.f32.mrb[0].mxu0
        %v471 = vpop.f32.mrb[0].mxu0
        %v472 = vadd.f32 0.0, %v471
        %v473 = vpop.f32.mrb[0].mxu0
        %474 = vdwg.mxu0
        %v475 = vld [vmem:[%s396] sm:$0x1]
        %v476 = vlaneseq
        %v477 = vshrl.u32 %v476, 7
        %v478 = vsub.s32 0, %v477
        %v479 = vrot.slane %v475, %v478
        %v480 = vadd.f32 %v469, %v479
        %v481 = vadd.f32 %v472, %v479
        %v482 = vld [vmem:[%s396 + $0x1] sm:$0x1]
        %v483 = vlaneseq
        %v484 = vshrl.u32 %v483, 7
        %v485 = vsub.s32 0, %v484
        %v486 = vrot.slane %v482, %v485
        %488 = vrot.lane.b32.xlu0 %v486, 32
        %v489 = vpop.permute.xlu0 %488
        %v491 = vadd.f32 %v469, %v489
        %v492 = vadd.f32 %v472, %v489
        %v493 = vld [vmem:[%s396 + $0x2] sm:$0x1]
        %v494 = vlaneseq
        %v495 = vshrl.u32 %v494, 7
        %v496 = vsub.s32 0, %v495
        %v497 = vrot.slane %v493, %v496
        %499 = vrot.lane.b32.xlu0 %v497, 64
        %v500 = vpop.permute.xlu0 %499
        %v502 = vadd.f32 %v469, %v500
        %v503 = vadd.f32 %v472, %v500
        %v504 = vpack.c.bf16 %v480, %v480
        %v505 = vpack.c.bf16 %v481, %v481
        %v506 = vpack.c.bf16 %v491, %v491
        %v507 = vpack.c.bf16 %v492, %v492
        %v508 = vpack.c.bf16 %v502, %v502
        %v509 = vpack.c.bf16 %v503, %v503
        %511 = vrot.lane.b32.xlu0 %v506, 96
        %v512 = vpop.permute.xlu0 %511
        %vm513 = vcmask 64512
        %v515 = vsel %vm513, %v504, 0
        %v518 = vsel %vm513, %v512, 0
        %520 = vmatprep.subr.bf16.mxu0 0
        %521 = vmatpush1.bf16.xpose.msra.mxu0 %v518
        %522 = vmatprep.subr.bf16.mxu0 0
        %523 = vmatpush1.bf16.xpose.msra.mxu0 0
        %524 = vmatprep.subr.bf16.mxu0 0
        %525 = vmatpush1.bf16.xpose.msra.mxu0 0
        %526 = vmatprep.subr.bf16.mxu0 0
        %527 = vmatpush1.bf16.xpose.msra.mxu0 0
        %528 = vmatprep.subr.bf16.mxu0 0
        %529 = vmatpush1.bf16.xpose.msra.mxu0 0
        %530 = vmatprep.subr.bf16.mxu0 0
        %531 = vmatpush1.bf16.xpose.msra.mxu0 0
        %532 = vmatprep.subr.bf16.mxu0 0
        %533 = vmatpush1.bf16.xpose.msra.mxu0 0
        %534 = vmatprep.subr.bf16.mxu0 0
        %535 = vmatpush1.bf16.xpose.msra.mxu0 0
        %536 = vmatprep.subr.bf16.mxu0 0
        %537 = vmatpush1.bf16.xpose.msra.mxu0 0
        %538 = vmatprep.subr.bf16.mxu0 0
        %539 = vmatpush1.bf16.xpose.msra.mxu0 0
        %540 = vmatprep.subr.bf16.mxu0 0
        %541 = vmatpush1.bf16.xpose.msra.mxu0 0
        %542 = vmatprep.subr.bf16.mxu0 0
        %543 = vmatpush1.bf16.xpose.msra.mxu0 0
        %544 = vmatprep.subr.bf16.mxu0 0
        %545 = vmatpush1.bf16.xpose.msra.mxu0 0
        %546 = vmatprep.subr.bf16.mxu0 0
        %547 = vmatpush1.bf16.xpose.msra.mxu0 0
        %548 = vmatprep.subr.bf16.mxu0 0
        %549 = vmatpush1.bf16.xpose.msra.mxu0 0
        %550 = vmatprep.subr.bf16.mxu0 0
        %551 = vmatpush1.bf16.xpose.msra.mxu0 0
        %552 = vmatprep.mubr.bf16.mxu0 0
        %553 = vmatmul.mubr.bf16.gmra.mrb[0].mxu0 %v515
        %v554 = vpop.f32.mrb[0].mxu0
        %v555 = vadd.f32 0.0, %v554
        %v556 = vpop.f32.mrb[0].mxu0
        %v557 = vpop.f32.mrb[0].mxu0
        %v558 = vpop.f32.mrb[0].mxu0
        %559 = vdwg.mxu0
        %561 = vrot.lane.b32.xlu0 %v507, 96
        %v562 = vpop.permute.xlu0 %561
        %v564 = vsel %vm513, %v505, 0
        %v567 = vsel %vm513, %v562, 0
        %569 = vmatprep.subr.bf16.mxu0 0
        %570 = vmatpush1.bf16.xpose.msra.mxu0 %v567
        %571 = vmatprep.subr.bf16.mxu0 0
        %572 = vmatpush1.bf16.xpose.msra.mxu0 0
        %573 = vmatprep.subr.bf16.mxu0 0
        %574 = vmatpush1.bf16.xpose.msra.mxu0 0
        %575 = vmatprep.subr.bf16.mxu0 0
        %576 = vmatpush1.bf16.xpose.msra.mxu0 0
        %577 = vmatprep.subr.bf16.mxu0 0
        %578 = vmatpush1.bf16.xpose.msra.mxu0 0
        %579 = vmatprep.subr.bf16.mxu0 0
        %580 = vmatpush1.bf16.xpose.msra.mxu0 0
        %581 = vmatprep.subr.bf16.mxu0 0
        %582 = vmatpush1.bf16.xpose.msra.mxu0 0
        %583 = vmatprep.subr.bf16.mxu0 0
        %584 = vmatpush1.bf16.xpose.msra.mxu0 0
        %585 = vmatprep.subr.bf16.mxu0 0
        %586 = vmatpush1.bf16.xpose.msra.mxu0 0
        %587 = vmatprep.subr.bf16.mxu0 0
        %588 = vmatpush1.bf16.xpose.msra.mxu0 0
        %589 = vmatprep.subr.bf16.mxu0 0
        %590 = vmatpush1.bf16.xpose.msra.mxu0 0
        %591 = vmatprep.subr.bf16.mxu0 0
        %592 = vmatpush1.bf16.xpose.msra.mxu0 0
        %593 = vmatprep.subr.bf16.mxu0 0
        %594 = vmatpush1.bf16.xpose.msra.mxu0 0
        %595 = vmatprep.subr.bf16.mxu0 0
        %596 = vmatpush1.bf16.xpose.msra.mxu0 0
        %597 = vmatprep.subr.bf16.mxu0 0
        %598 = vmatpush1.bf16.xpose.msra.mxu0 0
        %599 = vmatprep.subr.bf16.mxu0 0
        %600 = vmatpush1.bf16.xpose.msra.mxu0 0
        %601 = vmatprep.mubr.bf16.mxu0 0
        %602 = vmatmul.mubr.bf16.gmra.mrb[0].mxu0 %v564
        %v603 = vpop.f32.mrb[0].mxu0
        %v604 = vadd.f32 0.0, %v603
        %v605 = vpop.f32.mrb[0].mxu0
        %v606 = vpop.f32.mrb[0].mxu0
        %v607 = vpop.f32.mrb[0].mxu0
        %608 = vdwg.mxu0
        %v609 = vmul.f32 %v555, 0.35355338
        %v610 = vmul.f32 %v604, 0.35355338
        %v611 = vsel %vm513, %v609, -inf
        %612 = vmax.xlane.f32.xlu0 %v611
        %v613 = vpop.xlane.xlu0 %612
        %v614 = vsel %vm513, %v610, -inf
        %615 = vmax.xlane.f32.xlu0 %v614
        %v616 = vpop.xlane.xlu0 %615
        %v617 = vsub.f32 %v609, %v613
        %v618 = vsub.f32 %v610, %v616
        %v619 = vmul.f32 %v617, 1.442695
        %v620 = vpow.pop %v619
        %v621 = vmul.f32 %v618, 1.442695
        %v622 = vpow.pop %v621
        %v623 = vsel %vm513, %v620, 0.0
        %624 = vadd.xlane.f32.xlu0 %v623
        %v625 = vpop.xlane.xlu0 %624
        %v626 = vsel %vm513, %v622, 0.0
        %627 = vadd.xlane.f32.xlu0 %v626
        %v628 = vpop.xlane.xlu0 %627
        %v629 = vrcp.pop %v625
        %v630 = vrcp.pop %v628
        %v631 = vmul.f32 %v620, %v629
        %v632 = vmul.f32 %v622, %v630
        %v633 = vpack.c.bf16 %v631, %v631
        %v634 = vpack.c.bf16 %v632, %v632
        %636 = vrot.lane.b32.xlu0 %v508, 64
        %v637 = vpop.permute.xlu0 %636
        %v639 = vsel %vm513, %v633, 0
        %vm641 = vcmask 1043456
        %v643 = vsel %vm641, %v637, 0
        %645 = vmatprep.subr.bf16.mxu0 0
        %646 = vmatpush1.bf16.msra.mxu0 %v643
        %647 = vmatprep.subr.bf16.mxu0 0
        %648 = vmatpush1.bf16.msra.mxu0 0
        %649 = vmatprep.subr.bf16.mxu0 0
        %650 = vmatpush1.bf16.msra.mxu0 0
        %651 = vmatprep.subr.bf16.mxu0 0
        %652 = vmatpush1.bf16.msra.mxu0 0
        %653 = vmatprep.subr.bf16.mxu0 0
        %654 = vmatpush1.bf16.msra.mxu0 0
        %655 = vmatprep.subr.bf16.mxu0 0
        %656 = vmatpush1.bf16.msra.mxu0 0
        %657 = vmatprep.subr.bf16.mxu0 0
        %658 = vmatpush1.bf16.msra.mxu0 0
        %659 = vmatprep.subr.bf16.mxu0 0
        %660 = vmatpush1.bf16.msra.mxu0 0
        %661 = vmatprep.subr.bf16.mxu0 0
        %662 = vmatpush1.bf16.msra.mxu0 0
        %663 = vmatprep.subr.bf16.mxu0 0
        %664 = vmatpush1.bf16.msra.mxu0 0
        %665 = vmatprep.subr.bf16.mxu0 0
        %666 = vmatpush1.bf16.msra.mxu0 0
        %667 = vmatprep.subr.bf16.mxu0 0
        %668 = vmatpush1.bf16.msra.mxu0 0
        %669 = vmatprep.subr.bf16.mxu0 0
        %670 = vmatpush1.bf16.msra.mxu0 0
        %671 = vmatprep.subr.bf16.mxu0 0
        %672 = vmatpush1.bf16.msra.mxu0 0
        %673 = vmatprep.subr.bf16.mxu0 0
        %674 = vmatpush1.bf16.msra.mxu0 0
        %675 = vmatprep.subr.bf16.mxu0 0
        %676 = vmatpush1.bf16.msra.mxu0 0
        %677 = vmatprep.mubr.bf16.mxu0 0
        %678 = vmatmul.mubr.bf16.gmra.mrb[0].mxu0 %v639
        %v679 = vpop.f32.mrb[0].mxu0
        %v680 = vadd.f32 0.0, %v679
        %v681 = vpop.f32.mrb[0].mxu0
        %v682 = vpop.f32.mrb[0].mxu0
        %v683 = vpop.f32.mrb[0].mxu0
        %684 = vdwg.mxu0
        %686 = vrot.lane.b32.xlu0 %v509, 64
        %v687 = vpop.permute.xlu0 %686
        %v689 = vsel %vm513, %v634, 0
        %v692 = vsel %vm641, %v687, 0
        %694 = vmatprep.subr.bf16.mxu0 0
        %695 = vmatpush1.bf16.msra.mxu0 %v692
        %696 = vmatprep.subr.bf16.mxu0 0
        %697 = vmatpush1.bf16.msra.mxu0 0
        %698 = vmatprep.subr.bf16.mxu0 0
        %699 = vmatpush1.bf16.msra.mxu0 0
        %700 = vmatprep.subr.bf16.mxu0 0
        %701 = vmatpush1.bf16.msra.mxu0 0
        %702 = vmatprep.subr.bf16.mxu0 0
        %703 = vmatpush1.bf16.msra.mxu0 0
        %704 = vmatprep.subr.bf16.mxu0 0
        %705 = vmatpush1.bf16.msra.mxu0 0
        %706 = vmatprep.subr.bf16.mxu0 0
        %707 = vmatpush1.bf16.msra.mxu0 0
        %708 = vmatprep.subr.bf16.mxu0 0
        %709 = vmatpush1.bf16.msra.mxu0 0
        %710 = vmatprep.subr.bf16.mxu0 0
        %711 = vmatpush1.bf16.msra.mxu0 0
        %712 = vmatprep.subr.bf16.mxu0 0
        %713 = vmatpush1.bf16.msra.mxu0 0
        %714 = vmatprep.subr.bf16.mxu0 0
        %715 = vmatpush1.bf16.msra.mxu0 0
        %716 = vmatprep.subr.bf16.mxu0 0
        %717 = vmatpush1.bf16.msra.mxu0 0
        %718 = vmatprep.subr.bf16.mxu0 0
        %719 = vmatpush1.bf16.msra.mxu0 0
        %720 = vmatprep.subr.bf16.mxu0 0
        %721 = vmatpush1.bf16.msra.mxu0 0
        %722 = vmatprep.subr.bf16.mxu0 0
        %723 = vmatpush1.bf16.msra.mxu0 0
        %724 = vmatprep.subr.bf16.mxu0 0
        %725 = vmatpush1.bf16.msra.mxu0 0
        %726 = vmatprep.mubr.bf16.mxu0 0
        %727 = vmatmul.mubr.bf16.gmra.mrb[0].mxu0 %v689
        %v728 = vpop.f32.mrb[0].mxu0
        %v729 = vadd.f32 0.0, %v728
        %v730 = vpop.f32.mrb[0].mxu0
        %v731 = vpop.f32.mrb[0].mxu0
        %v732 = vpop.f32.mrb[0].mxu0
        %733 = vdwg.mxu0
        %734 = vst.msk [vmem:[#allocation2] sm:$0xff] %vm513, %v680
        %735 = vst.msk [vmem:[#allocation2 + $0x8] sm:$0xff] %vm513, %v729
        %737 = vrot.lane.b32.xlu0 %v504, 120
        %v738 = vpop.permute.xlu0 %737
        %739 = vrot.lane.b32.xlu0 %v506, 88
        %v740 = vpop.permute.xlu0 %739
        %v742 = vsel %vm513, %v738, 0
        %v745 = vsel %vm513, %v740, 0
        %747 = vmatprep.subr.bf16.mxu0 0
        %748 = vmatpush1.bf16.xpose.msra.mxu0 %v745
        %749 = vmatprep.subr.bf16.mxu0 0
        %750 = vmatpush1.bf16.xpose.msra.mxu0 0
        %751 = vmatprep.subr.bf16.mxu0 0
        %752 = vmatpush1.bf16.xpose.msra.mxu0 0
        %753 = vmatprep.subr.bf16.mxu0 0
        %754 = vmatpush1.bf16.xpose.msra.mxu0 0
        %755 = vmatprep.subr.bf16.mxu0 0
        %756 = vmatpush1.bf16.xpose.msra.mxu0 0
        %757 = vmatprep.subr.bf16.mxu0 0
        %758 = vmatpush1.bf16.xpose.msra.mxu0 0
        %759 = vmatprep.subr.bf16.mxu0 0
        %760 = vmatpush1.bf16.xpose.msra.mxu0 0
        %761 = vmatprep.subr.bf16.mxu0 0
        %762 = vmatpush1.bf16.xpose.msra.mxu0 0
        %763 = vmatprep.subr.bf16.mxu0 0
        %764 = vmatpush1.bf16.xpose.msra.mxu0 0
        %765 = vmatprep.subr.bf16.mxu0 0
        %766 = vmatpush1.bf16.xpose.msra.mxu0 0
        %767 = vmatprep.subr.bf16.mxu0 0
        %768 = vmatpush1.bf16.xpose.msra.mxu0 0
        %769 = vmatprep.subr.bf16.mxu0 0
        %770 = vmatpush1.bf16.xpose.msra.mxu0 0
        %771 = vmatprep.subr.bf16.mxu0 0
        %772 = vmatpush1.bf16.xpose.msra.mxu0 0
        %773 = vmatprep.subr.bf16.mxu0 0
        %774 = vmatpush1.bf16.xpose.msra.mxu0 0
        %775 = vmatprep.subr.bf16.mxu0 0
        %776 = vmatpush1.bf16.xpose.msra.mxu0 0
        %777 = vmatprep.subr.bf16.mxu0 0
        %778 = vmatpush1.bf16.xpose.msra.mxu0 0
        %779 = vmatprep.mubr.bf16.mxu0 0
        %780 = vmatmul.mubr.bf16.gmra.mrb[0].mxu0 %v742
        %v781 = vpop.f32.mrb[0].mxu0
        %v782 = vadd.f32 0.0, %v781
        %v783 = vpop.f32.mrb[0].mxu0
        %v784 = vpop.f32.mrb[0].mxu0
        %v785 = vpop.f32.mrb[0].mxu0
        %786 = vdwg.mxu0
        %788 = vrot.lane.b32.xlu0 %v505, 120
        %v789 = vpop.permute.xlu0 %788
        %790 = vrot.lane.b32.xlu0 %v507, 88
        %v791 = vpop.permute.xlu0 %790
        %v793 = vsel %vm513, %v789, 0
        %v796 = vsel %vm513, %v791, 0
        %798 = vmatprep.subr.bf16.mxu0 0
        %799 = vmatpush1.bf16.xpose.msra.mxu0 %v796
        %800 = vmatprep.subr.bf16.mxu0 0
        %801 = vmatpush1.bf16.xpose.msra.mxu0 0
        %802 = vmatprep.subr.bf16.mxu0 0
        %803 = vmatpush1.bf16.xpose.msra.mxu0 0
        %804 = vmatprep.subr.bf16.mxu0 0
        %805 = vmatpush1.bf16.xpose.msra.mxu0 0
        %806 = vmatprep.subr.bf16.mxu0 0
        %807 = vmatpush1.bf16.xpose.msra.mxu0 0
        %808 = vmatprep.subr.bf16.mxu0 0
        %809 = vmatpush1.bf16.xpose.msra.mxu0 0
        %810 = vmatprep.subr.bf16.mxu0 0
        %811 = vmatpush1.bf16.xpose.msra.mxu0 0
        %812 = vmatprep.subr.bf16.mxu0 0
        %813 = vmatpush1.bf16.xpose.msra.mxu0 0
        %814 = vmatprep.subr.bf16.mxu0 0
        %815 = vmatpush1.bf16.xpose.msra.mxu0 0
        %816 = vmatprep.subr.bf16.mxu0 0
        %817 = vmatpush1.bf16.xpose.msra.mxu0 0
        %818 = vmatprep.subr.bf16.mxu0 0
        %819 = vmatpush1.bf16.xpose.msra.mxu0 0
        %820 = vmatprep.subr.bf16.mxu0 0
        %821 = vmatpush1.bf16.xpose.msra.mxu0 0
        %822 = vmatprep.subr.bf16.mxu0 0
        %823 = vmatpush1.bf16.xpose.msra.mxu0 0
        %824 = vmatprep.subr.bf16.mxu0 0
        %825 = vmatpush1.bf16.xpose.msra.mxu0 0
        %826 = vmatprep.subr.bf16.mxu0 0
        %827 = vmatpush1.bf16.xpose.msra.mxu0 0
        %828 = vmatprep.subr.bf16.mxu0 0
        %829 = vmatpush1.bf16.xpose.msra.mxu0 0
        %830 = vmatprep.mubr.bf16.mxu0 0
        %831 = vmatmul.mubr.bf16.gmra.mrb[0].mxu0 %v793
        %v832 = vpop.f32.mrb[0].mxu0
        %v833 = vadd.f32 0.0, %v832
        %v834 = vpop.f32.mrb[0].mxu0
        %v835 = vpop.f32.mrb[0].mxu0
        %v836 = vpop.f32.mrb[0].mxu0
        %837 = vdwg.mxu0
        %v838 = vmul.f32 %v782, 0.35355338
        %v839 = vmul.f32 %v833, 0.35355338
        %v840 = vsel %vm513, %v838, -inf
        %841 = vmax.xlane.f32.xlu0 %v840
        %v842 = vpop.xlane.xlu0 %841
        %v843 = vsel %vm513, %v839, -inf
        %844 = vmax.xlane.f32.xlu0 %v843
        %v845 = vpop.xlane.xlu0 %844
        %v846 = vsub.f32 %v838, %v842
        %v847 = vsub.f32 %v839, %v845
        %v848 = vmul.f32 %v846, 1.442695
        %v849 = vpow.pop %v848
        %v850 = vmul.f32 %v847, 1.442695
        %v851 = vpow.pop %v850
        %v852 = vsel %vm513, %v849, 0.0
        %853 = vadd.xlane.f32.xlu0 %v852
        %v854 = vpop.xlane.xlu0 %853
        %v855 = vsel %vm513, %v851, 0.0
        %856 = vadd.xlane.f32.xlu0 %v855
        %v857 = vpop.xlane.xlu0 %856
        %v858 = vrcp.pop %v854
        %v859 = vrcp.pop %v857
        %v860 = vmul.f32 %v849, %v858
        %v861 = vmul.f32 %v851, %v859
        %v862 = vpack.c.bf16 %v860, %v860
        %v863 = vpack.c.bf16 %v861, %v861
        %864 = vrot.lane.b32.xlu0 %v508, 56
        %v865 = vpop.permute.xlu0 %864
        %v867 = vsel %vm513, %v862, 0
        %v870 = vsel %vm641, %v865, 0
        %872 = vmatprep.subr.bf16.mxu0 0
        %873 = vmatpush1.bf16.msra.mxu0 %v870
        %874 = vmatprep.subr.bf16.mxu0 0
        %875 = vmatpush1.bf16.msra.mxu0 0
        %876 = vmatprep.subr.bf16.mxu0 0
        %877 = vmatpush1.bf16.msra.mxu0 0
        %878 = vmatprep.subr.bf16.mxu0 0
        %879 = vmatpush1.bf16.msra.mxu0 0
        %880 = vmatprep.subr.bf16.mxu0 0
        %881 = vmatpush1.bf16.msra.mxu0 0
        %882 = vmatprep.subr.bf16.mxu0 0
        %883 = vmatpush1.bf16.msra.mxu0 0
        %884 = vmatprep.subr.bf16.mxu0 0
        %885 = vmatpush1.bf16.msra.mxu0 0
        %886 = vmatprep.subr.bf16.mxu0 0
        %887 = vmatpush1.bf16.msra.mxu0 0
        %888 = vmatprep.subr.bf16.mxu0 0
        %889 = vmatpush1.bf16.msra.mxu0 0
        %890 = vmatprep.subr.bf16.mxu0 0
        %891 = vmatpush1.bf16.msra.mxu0 0
        %892 = vmatprep.subr.bf16.mxu0 0
        %893 = vmatpush1.bf16.msra.mxu0 0
        %894 = vmatprep.subr.bf16.mxu0 0
        %895 = vmatpush1.bf16.msra.mxu0 0
        %896 = vmatprep.subr.bf16.mxu0 0
        %897 = vmatpush1.bf16.msra.mxu0 0
        %898 = vmatprep.subr.bf16.mxu0 0
        %899 = vmatpush1.bf16.msra.mxu0 0
        %900 = vmatprep.subr.bf16.mxu0 0
        %901 = vmatpush1.bf16.msra.mxu0 0
        %902 = vmatprep.subr.bf16.mxu0 0
        %903 = vmatpush1.bf16.msra.mxu0 0
        %904 = vmatprep.mubr.bf16.mxu0 0
        %905 = vmatmul.mubr.bf16.gmra.mrb[0].mxu0 %v867
        %v906 = vpop.f32.mrb[0].mxu0
        %v907 = vadd.f32 0.0, %v906
        %v908 = vpop.f32.mrb[0].mxu0
        %v909 = vpop.f32.mrb[0].mxu0
        %v910 = vpop.f32.mrb[0].mxu0
        %911 = vdwg.mxu0
        %912 = vrot.lane.b32.xlu0 %v509, 56
        %v913 = vpop.permute.xlu0 %912
        %v915 = vsel %vm513, %v863, 0
        %v918 = vsel %vm641, %v913, 0
        %920 = vmatprep.subr.bf16.mxu0 0
        %921 = vmatpush1.bf16.msra.mxu0 %v918
        %922 = vmatprep.subr.bf16.mxu0 0
        %923 = vmatpush1.bf16.msra.mxu0 0
        %924 = vmatprep.subr.bf16.mxu0 0
        %925 = vmatpush1.bf16.msra.mxu0 0
        %926 = vmatprep.subr.bf16.mxu0 0
        %927 = vmatpush1.bf16.msra.mxu0 0
        %928 = vmatprep.subr.bf16.mxu0 0
        %929 = vmatpush1.bf16.msra.mxu0 0
        %930 = vmatprep.subr.bf16.mxu0 0
        %931 = vmatpush1.bf16.msra.mxu0 0
        %932 = vmatprep.subr.bf16.mxu0 0
        %933 = vmatpush1.bf16.msra.mxu0 0
        %934 = vmatprep.subr.bf16.mxu0 0
        %935 = vmatpush1.bf16.msra.mxu0 0
        %936 = vmatprep.subr.bf16.mxu0 0
        %937 = vmatpush1.bf16.msra.mxu0 0
        %938 = vmatprep.subr.bf16.mxu0 0
        %939 = vmatpush1.bf16.msra.mxu0 0
        %940 = vmatprep.subr.bf16.mxu0 0
        %941 = vmatpush1.bf16.msra.mxu0 0
        %942 = vmatprep.subr.bf16.mxu0 0
        %943 = vmatpush1.bf16.msra.mxu0 0
        %944 = vmatprep.subr.bf16.mxu0 0
        %945 = vmatpush1.bf16.msra.mxu0 0
        %946 = vmatprep.subr.bf16.mxu0 0
        %947 = vmatpush1.bf16.msra.mxu0 0
        %948 = vmatprep.subr.bf16.mxu0 0
        %949 = vmatpush1.bf16.msra.mxu0 0
        %950 = vmatprep.subr.bf16.mxu0 0
        %951 = vmatpush1.bf16.msra.mxu0 0
        %952 = vmatprep.mubr.bf16.mxu0 0
        %953 = vmatmul.mubr.bf16.gmra.mrb[0].mxu0 %v915
        %v954 = vpop.f32.mrb[0].mxu0
        %v955 = vadd.f32 0.0, %v954
        %v956 = vpop.f32.mrb[0].mxu0
        %v957 = vpop.f32.mrb[0].mxu0
        %v958 = vpop.f32.mrb[0].mxu0
        %959 = vdwg.mxu0
        %962 = vrot.lane.b32.xlu0 %v907, 8
        %v963 = vpop.permute.xlu0 %962
        %964 = vrot.lane.b32.xlu0 %v955, 8
        %v965 = vpop.permute.xlu0 %964
        %vm968 = vcmask 130112
        %969 = vst.msk [vmem:[#allocation2] sm:$0xff] %vm968, %v963
        %970 = vst.msk [vmem:[#allocation2 + $0x8] sm:$0xff] %vm968, %v965
        %971 = vrot.lane.b32.xlu0 %v504, 112
        %v972 = vpop.permute.xlu0 %971
        %973 = vrot.lane.b32.xlu0 %v506, 80
        %v974 = vpop.permute.xlu0 %973
        %v976 = vsel %vm513, %v972, 0
        %v979 = vsel %vm513, %v974, 0
        %981 = vmatprep.subr.bf16.mxu0 0
        %982 = vmatpush1.bf16.xpose.msra.mxu0 %v979
        %983 = vmatprep.subr.bf16.mxu0 0
        %984 = vmatpush1.bf16.xpose.msra.mxu0 0
        %985 = vmatprep.subr.bf16.mxu0 0
        %986 = vmatpush1.bf16.xpose.msra.mxu0 0
        %987 = vmatprep.subr.bf16.mxu0 0
        %988 = vmatpush1.bf16.xpose.msra.mxu0 0
        %989 = vmatprep.subr.bf16.mxu0 0
        %990 = vmatpush1.bf16.xpose.msra.mxu0 0
        %991 = vmatprep.subr.bf16.mxu0 0
        %992 = vmatpush1.bf16.xpose.msra.mxu0 0
        %993 = vmatprep.subr.bf16.mxu0 0
        %994 = vmatpush1.bf16.xpose.msra.mxu0 0
        %995 = vmatprep.subr.bf16.mxu0 0
        %996 = vmatpush1.bf16.xpose.msra.mxu0 0
        %997 = vmatprep.subr.bf16.mxu0 0
        %998 = vmatpush1.bf16.xpose.msra.mxu0 0
        %999 = vmatprep.subr.bf16.mxu0 0
        %1000 = vmatpush1.bf16.xpose.msra.mxu0 0
        %1001 = vmatprep.subr.bf16.mxu0 0
        %1002 = vmatpush1.bf16.xpose.msra.mxu0 0
        %1003 = vmatprep.subr.bf16.mxu0 0
        %1004 = vmatpush1.bf16.xpose.msra.mxu0 0
        %1005 = vmatprep.subr.bf16.mxu0 0
        %1006 = vmatpush1.bf16.xpose.msra.mxu0 0
        %1007 = vmatprep.subr.bf16.mxu0 0
        %1008 = vmatpush1.bf16.xpose.msra.mxu0 0
        %1009 = vmatprep.subr.bf16.mxu0 0
        %1010 = vmatpush1.bf16.xpose.msra.mxu0 0
        %1011 = vmatprep.subr.bf16.mxu0 0
        %1012 = vmatpush1.bf16.xpose.msra.mxu0 0
        %1013 = vmatprep.mubr.bf16.mxu0 0
        %1014 = vmatmul.mubr.bf16.gmra.mrb[0].mxu0 %v976
        %v1015 = vpop.f32.mrb[0].mxu0
        %v1016 = vadd.f32 0.0, %v1015
        %v1017 = vpop.f32.mrb[0].mxu0
        %v1018 = vpop.f32.mrb[0].mxu0
        %v1019 = vpop.f32.mrb[0].mxu0
        %1020 = vdwg.mxu0
        %1021 = vrot.lane.b32.xlu0 %v505, 112
        %v1022 = vpop.permute.xlu0 %1021
        %1023 = vrot.lane.b32.xlu0 %v507, 80
        %v1024 = vpop.permute.xlu0 %1023
        %v1026 = vsel %vm513, %v1022, 0
        %v1029 = vsel %vm513, %v1024, 0
        %1031 = vmatprep.subr.bf16.mxu0 0
        %1032 = vmatpush1.bf16.xpose.msra.mxu0 %v1029
        %1033 = vmatprep.subr.bf16.mxu0 0
        %1034 = vmatpush1.bf16.xpose.msra.mxu0 0
        %1035 = vmatprep.subr.bf16.mxu0 0
        %1036 = vmatpush1.bf16.xpose.msra.mxu0 0
        %1037 = vmatprep.subr.bf16.mxu0 0
        %1038 = vmatpush1.bf16.xpose.msra.mxu0 0
        %1039 = vmatprep.subr.bf16.mxu0 0
        %1040 = vmatpush1.bf16.xpose.msra.mxu0 0
        %1041 = vmatprep.subr.bf16.mxu0 0
        %1042 = vmatpush1.bf16.xpose.msra.mxu0 0
        %1043 = vmatprep.subr.bf16.mxu0 0
        %1044 = vmatpush1.bf16.xpose.msra.mxu0 0
        %1045 = vmatprep.subr.bf16.mxu0 0
        %1046 = vmatpush1.bf16.xpose.msra.mxu0 0
        %1047 = vmatprep.subr.bf16.mxu0 0
        %1048 = vmatpush1.bf16.xpose.msra.mxu0 0
        %1049 = vmatprep.subr.bf16.mxu0 0
        %1050 = vmatpush1.bf16.xpose.msra.mxu0 0
        %1051 = vmatprep.subr.bf16.mxu0 0
        %1052 = vmatpush1.bf16.xpose.msra.mxu0 0
        %1053 = vmatprep.subr.bf16.mxu0 0
        %1054 = vmatpush1.bf16.xpose.msra.mxu0 0
        %1055 = vmatprep.subr.bf16.mxu0 0
        %1056 = vmatpush1.bf16.xpose.msra.mxu0 0
        %1057 = vmatprep.subr.bf16.mxu0 0
        %1058 = vmatpush1.bf16.xpose.msra.mxu0 0
        %1059 = vmatprep.subr.bf16.mxu0 0
        %1060 = vmatpush1.bf16.xpose.msra.mxu0 0
        %1061 = vmatprep.subr.bf16.mxu0 0
        %1062 = vmatpush1.bf16.xpose.msra.mxu0 0
        %1063 = vmatprep.mubr.bf16.mxu0 0
        %1064 = vmatmul.mubr.bf16.gmra.mrb[0].mxu0 %v1026
        %v1065 = vpop.f32.mrb[0].mxu0
        %v1066 = vadd.f32 0.0, %v1065
        %v1067 = vpop.f32.mrb[0].mxu0
        %v1068 = vpop.f32.mrb[0].mxu0
        %v1069 = vpop.f32.mrb[0].mxu0
        %1070 = vdwg.mxu0
        %v1071 = vmul.f32 %v1016, 0.35355338
        %v1072 = vmul.f32 %v1066, 0.35355338
        %v1073 = vsel %vm513, %v1071, -inf
        %1074 = vmax.xlane.f32.xlu0 %v1073
        %v1075 = vpop.xlane.xlu0 %1074
        %v1076 = vsel %vm513, %v1072, -inf
        %1077 = vmax.xlane.f32.xlu0 %v1076
        %v1078 = vpop.xlane.xlu0 %1077
        %v1079 = vsub.f32 %v1071, %v1075
        %v1080 = vsub.f32 %v1072, %v1078
        %v1081 = vmul.f32 %v1079, 1.442695
        %v1082 = vpow.pop %v1081
        %v1083 = vmul.f32 %v1080, 1.442695
        %v1084 = vpow.pop %v1083
        %v1085 = vsel %vm513, %v1082, 0.0
        %1086 = vadd.xlane.f32.xlu0 %v1085
        %v1087 = vpop.xlane.xlu0 %1086
        %v1088 = vsel %vm513, %v1084, 0.0
        %1089 = vadd.xlane.f32.xlu0 %v1088
        %v1090 = vpop.xlane.xlu0 %1089
        %v1091 = vrcp.pop %v1087
        %v1092 = vrcp.pop %v1090
        %v1093 = vmul.f32 %v1082, %v1091
        %v1094 = vmul.f32 %v1084, %v1092
        %v1095 = vpack.c.bf16 %v1093, %v1093
        %v1096 = vpack.c.bf16 %v1094, %v1094
        %1097 = vrot.lane.b32.xlu0 %v508, 48
        %v1098 = vpop.permute.xlu0 %1097
        %v1100 = vsel %vm513, %v1095, 0
        %v1103 = vsel %vm641, %v1098, 0
        %1105 = vmatprep.subr.bf16.mxu0 0
        %1106 = vmatpush1.bf16.msra.mxu0 %v1103
        %1107 = vmatprep.subr.bf16.mxu0 0
        %1108 = vmatpush1.bf16.msra.mxu0 0
        %1109 = vmatprep.subr.bf16.mxu0 0
        %1110 = vmatpush1.bf16.msra.mxu0 0
        %1111 = vmatprep.subr.bf16.mxu0 0
        %1112 = vmatpush1.bf16.msra.mxu0 0
        %1113 = vmatprep.subr.bf16.mxu0 0
        %1114 = vmatpush1.bf16.msra.mxu0 0
        %1115 = vmatprep.subr.bf16.mxu0 0
        %1116 = vmatpush1.bf16.msra.mxu0 0
        %1117 = vmatprep.subr.bf16.mxu0 0
        %1118 = vmatpush1.bf16.msra.mxu0 0
        %1119 = vmatprep.subr.bf16.mxu0 0
        %1120 = vmatpush1.bf16.msra.mxu0 0
        %1121 = vmatprep.subr.bf16.mxu0 0
        %1122 = vmatpush1.bf16.msra.mxu0 0
        %1123 = vmatprep.subr.bf16.mxu0 0
        %1124 = vmatpush1.bf16.msra.mxu0 0
        %1125 = vmatprep.subr.bf16.mxu0 0
        %1126 = vmatpush1.bf16.msra.mxu0 0
        %1127 = vmatprep.subr.bf16.mxu0 0
        %1128 = vmatpush1.bf16.msra.mxu0 0
        %1129 = vmatprep.subr.bf16.mxu0 0
        %1130 = vmatpush1.bf16.msra.mxu0 0
        %1131 = vmatprep.subr.bf16.mxu0 0
        %1132 = vmatpush1.bf16.msra.mxu0 0
        %1133 = vmatprep.subr.bf16.mxu0 0
        %1134 = vmatpush1.bf16.msra.mxu0 0
        %1135 = vmatprep.subr.bf16.mxu0 0
        %1136 = vmatpush1.bf16.msra.mxu0 0
        %1137 = vmatprep.mubr.bf16.mxu0 0
        %1138 = vmatmul.mubr.bf16.gmra.mrb[0].mxu0 %v1100
        %v1139 = vpop.f32.mrb[0].mxu0
        %v1140 = vadd.f32 0.0, %v1139
        %v1141 = vpop.f32.mrb[0].mxu0
        %v1142 = vpop.f32.mrb[0].mxu0
        %v1143 = vpop.f32.mrb[0].mxu0
        %1144 = vdwg.mxu0
        %1145 = vrot.lane.b32.xlu0 %v509, 48
        %v1146 = vpop.permute.xlu0 %1145
        %v1148 = vsel %vm513, %v1096, 0
        %v1151 = vsel %vm641, %v1146, 0
        %1153 = vmatprep.subr.bf16.mxu0 0
        %1154 = vmatpush1.bf16.msra.mxu0 %v1151
        %1155 = vmatprep.subr.bf16.mxu0 0
        %1156 = vmatpush1.bf16.msra.mxu0 0
        %1157 = vmatprep.subr.bf16.mxu0 0
        %1158 = vmatpush1.bf16.msra.mxu0 0
        %1159 = vmatprep.subr.bf16.mxu0 0
        %1160 = vmatpush1.bf16.msra.mxu0 0
        %1161 = vmatprep.subr.bf16.mxu0 0
        %1162 = vmatpush1.bf16.msra.mxu0 0
        %1163 = vmatprep.subr.bf16.mxu0 0
        %1164 = vmatpush1.bf16.msra.mxu0 0
        %1165 = vmatprep.subr.bf16.mxu0 0
        %1166 = vmatpush1.bf16.msra.mxu0 0
        %1167 = vmatprep.subr.bf16.mxu0 0
        %1168 = vmatpush1.bf16.msra.mxu0 0
        %1169 = vmatprep.subr.bf16.mxu0 0
        %1170 = vmatpush1.bf16.msra.mxu0 0
        %1171 = vmatprep.subr.bf16.mxu0 0
        %1172 = vmatpush1.bf16.msra.mxu0 0
        %1173 = vmatprep.subr.bf16.mxu0 0
        %1174 = vmatpush1.bf16.msra.mxu0 0
        %1175 = vmatprep.subr.bf16.mxu0 0
        %1176 = vmatpush1.bf16.msra.mxu0 0
        %1177 = vmatprep.subr.bf16.mxu0 0
        %1178 = vmatpush1.bf16.msra.mxu0 0
        %1179 = vmatprep.subr.bf16.mxu0 0
        %1180 = vmatpush1.bf16.msra.mxu0 0
        %1181 = vmatprep.subr.bf16.mxu0 0
        %1182 = vmatpush1.bf16.msra.mxu0 0
        %1183 = vmatprep.subr.bf16.mxu0 0
        %1184 = vmatpush1.bf16.msra.mxu0 0
        %1185 = vmatprep.mubr.bf16.mxu0 0
        %1186 = vmatmul.mubr.bf16.gmra.mrb[0].mxu0 %v1148
        %v1187 = vpop.f32.mrb[0].mxu0
        %v1188 = vadd.f32 0.0, %v1187
        %v1189 = vpop.f32.mrb[0].mxu0
        %v1190 = vpop.f32.mrb[0].mxu0
        %v1191 = vpop.f32.mrb[0].mxu0
        %1192 = vdwg.mxu0
        %1195 = vrot.lane.b32.xlu0 %v1140, 16
        %v1196 = vpop.permute.xlu0 %1195
        %1197 = vrot.lane.b32.xlu0 %v1188, 16
        %v1198 = vpop.permute.xlu0 %1197
        %vm1201 = vcmask 195712
        %1202 = vst.msk [vmem:[#allocation2] sm:$0xff] %vm1201, %v1196
        %1203 = vst.msk [vmem:[#allocation2 + $0x8] sm:$0xff] %vm1201, %v1198
        %1204 = vrot.lane.b32.xlu0 %v504, 104
        %v1205 = vpop.permute.xlu0 %1204
        %1206 = vrot.lane.b32.xlu0 %v506, 72
        %v1207 = vpop.permute.xlu0 %1206
        %v1209 = vsel %vm513, %v1205, 0
        %v1212 = vsel %vm513, %v1207, 0
        %1214 = vmatprep.subr.bf16.mxu0 0
        %1215 = vmatpush1.bf16.xpose.msra.mxu0 %v1212
        %1216 = vmatprep.subr.bf16.mxu0 0
        %1217 = vmatpush1.bf16.xpose.msra.mxu0 0
        %1218 = vmatprep.subr.bf16.mxu0 0
        %1219 = vmatpush1.bf16.xpose.msra.mxu0 0
        %1220 = vmatprep.subr.bf16.mxu0 0
        %1221 = vmatpush1.bf16.xpose.msra.mxu0 0
        %1222 = vmatprep.subr.bf16.mxu0 0
        %1223 = vmatpush1.bf16.xpose.msra.mxu0 0
        %1224 = vmatprep.subr.bf16.mxu0 0
        %1225 = vmatpush1.bf16.xpose.msra.mxu0 0
        %1226 = vmatprep.subr.bf16.mxu0 0
        %1227 = vmatpush1.bf16.xpose.msra.mxu0 0
        %1228 = vmatprep.subr.bf16.mxu0 0
        %1229 = vmatpush1.bf16.xpose.msra.mxu0 0
        %1230 = vmatprep.subr.bf16.mxu0 0
        %1231 = vmatpush1.bf16.xpose.msra.mxu0 0
        %1232 = vmatprep.subr.bf16.mxu0 0
        %1233 = vmatpush1.bf16.xpose.msra.mxu0 0
        %1234 = vmatprep.subr.bf16.mxu0 0
        %1235 = vmatpush1.bf16.xpose.msra.mxu0 0
        %1236 = vmatprep.subr.bf16.mxu0 0
        %1237 = vmatpush1.bf16.xpose.msra.mxu0 0
        %1238 = vmatprep.subr.bf16.mxu0 0
        %1239 = vmatpush1.bf16.xpose.msra.mxu0 0
        %1240 = vmatprep.subr.bf16.mxu0 0
        %1241 = vmatpush1.bf16.xpose.msra.mxu0 0
        %1242 = vmatprep.subr.bf16.mxu0 0
        %1243 = vmatpush1.bf16.xpose.msra.mxu0 0
        %1244 = vmatprep.subr.bf16.mxu0 0
        %1245 = vmatpush1.bf16.xpose.msra.mxu0 0
        %1246 = vmatprep.mubr.bf16.mxu0 0
        %1247 = vmatmul.mubr.bf16.gmra.mrb[0].mxu0 %v1209
        %v1248 = vpop.f32.mrb[0].mxu0
        %v1249 = vadd.f32 0.0, %v1248
        %v1250 = vpop.f32.mrb[0].mxu0
        %v1251 = vpop.f32.mrb[0].mxu0
        %v1252 = vpop.f32.mrb[0].mxu0
        %1253 = vdwg.mxu0
        %1254 = vrot.lane.b32.xlu0 %v505, 104
        %v1255 = vpop.permute.xlu0 %1254
        %1256 = vrot.lane.b32.xlu0 %v507, 72
        %v1257 = vpop.permute.xlu0 %1256
        %v1259 = vsel %vm513, %v1255, 0
        %v1262 = vsel %vm513, %v1257, 0
        %1264 = vmatprep.subr.bf16.mxu0 0
        %1265 = vmatpush1.bf16.xpose.msra.mxu0 %v1262
        %1266 = vmatprep.subr.bf16.mxu0 0
        %1267 = vmatpush1.bf16.xpose.msra.mxu0 0
        %1268 = vmatprep.subr.bf16.mxu0 0
        %1269 = vmatpush1.bf16.xpose.msra.mxu0 0
        %1270 = vmatprep.subr.bf16.mxu0 0
        %1271 = vmatpush1.bf16.xpose.msra.mxu0 0
        %1272 = vmatprep.subr.bf16.mxu0 0
        %1273 = vmatpush1.bf16.xpose.msra.mxu0 0
        %1274 = vmatprep.subr.bf16.mxu0 0
        %1275 = vmatpush1.bf16.xpose.msra.mxu0 0
        %1276 = vmatprep.subr.bf16.mxu0 0
        %1277 = vmatpush1.bf16.xpose.msra.mxu0 0
        %1278 = vmatprep.subr.bf16.mxu0 0
        %1279 = vmatpush1.bf16.xpose.msra.mxu0 0
        %1280 = vmatprep.subr.bf16.mxu0 0
        %1281 = vmatpush1.bf16.xpose.msra.mxu0 0
        %1282 = vmatprep.subr.bf16.mxu0 0
        %1283 = vmatpush1.bf16.xpose.msra.mxu0 0
        %1284 = vmatprep.subr.bf16.mxu0 0
        %1285 = vmatpush1.bf16.xpose.msra.mxu0 0
        %1286 = vmatprep.subr.bf16.mxu0 0
        %1287 = vmatpush1.bf16.xpose.msra.mxu0 0
        %1288 = vmatprep.subr.bf16.mxu0 0
        %1289 = vmatpush1.bf16.xpose.msra.mxu0 0
        %1290 = vmatprep.subr.bf16.mxu0 0
        %1291 = vmatpush1.bf16.xpose.msra.mxu0 0
        %1292 = vmatprep.subr.bf16.mxu0 0
        %1293 = vmatpush1.bf16.xpose.msra.mxu0 0
        %1294 = vmatprep.subr.bf16.mxu0 0
        %1295 = vmatpush1.bf16.xpose.msra.mxu0 0
        %1296 = vmatprep.mubr.bf16.mxu0 0
        %1297 = vmatmul.mubr.bf16.gmra.mrb[0].mxu0 %v1259
        %v1298 = vpop.f32.mrb[0].mxu0
        %v1299 = vadd.f32 0.0, %v1298
        %v1300 = vpop.f32.mrb[0].mxu0
        %v1301 = vpop.f32.mrb[0].mxu0
        %v1302 = vpop.f32.mrb[0].mxu0
        %1303 = vdwg.mxu0
        %v1304 = vmul.f32 %v1249, 0.35355338
        %v1305 = vmul.f32 %v1299, 0.35355338
        %v1306 = vsel %vm513, %v1304, -inf
        %1307 = vmax.xlane.f32.xlu0 %v1306
        %v1308 = vpop.xlane.xlu0 %1307
        %v1309 = vsel %vm513, %v1305, -inf
        %1310 = vmax.xlane.f32.xlu0 %v1309
        %v1311 = vpop.xlane.xlu0 %1310
        %v1312 = vsub.f32 %v1304, %v1308
        %v1313 = vsub.f32 %v1305, %v1311
        %v1314 = vmul.f32 %v1312, 1.442695
        %v1315 = vpow.pop %v1314
        %v1316 = vmul.f32 %v1313, 1.442695
        %v1317 = vpow.pop %v1316
        %v1318 = vsel %vm513, %v1315, 0.0
        %1319 = vadd.xlane.f32.xlu0 %v1318
        %v1320 = vpop.xlane.xlu0 %1319
        %v1321 = vsel %vm513, %v1317, 0.0
        %1322 = vadd.xlane.f32.xlu0 %v1321
        %v1323 = vpop.xlane.xlu0 %1322
        %v1324 = vrcp.pop %v1320
        %v1325 = vrcp.pop %v1323
        %v1326 = vmul.f32 %v1315, %v1324
        %v1327 = vmul.f32 %v1317, %v1325
        %v1328 = vpack.c.bf16 %v1326, %v1326
        %v1329 = vpack.c.bf16 %v1327, %v1327
        %1330 = vrot.lane.b32.xlu0 %v508, 40
        %v1331 = vpop.permute.xlu0 %1330
        %v1333 = vsel %vm513, %v1328, 0
        %v1336 = vsel %vm641, %v1331, 0
        %1338 = vmatprep.subr.bf16.mxu0 0
        %1339 = vmatpush1.bf16.msra.mxu0 %v1336
        %1340 = vmatprep.subr.bf16.mxu0 0
        %1341 = vmatpush1.bf16.msra.mxu0 0
        %1342 = vmatprep.subr.bf16.mxu0 0
        %1343 = vmatpush1.bf16.msra.mxu0 0
        %1344 = vmatprep.subr.bf16.mxu0 0
        %1345 = vmatpush1.bf16.msra.mxu0 0
        %1346 = vmatprep.subr.bf16.mxu0 0
        %1347 = vmatpush1.bf16.msra.mxu0 0
        %1348 = vmatprep.subr.bf16.mxu0 0
        %1349 = vmatpush1.bf16.msra.mxu0 0
        %1350 = vmatprep.subr.bf16.mxu0 0
        %1351 = vmatpush1.bf16.msra.mxu0 0
        %1352 = vmatprep.subr.bf16.mxu0 0
        %1353 = vmatpush1.bf16.msra.mxu0 0
        %1354 = vmatprep.subr.bf16.mxu0 0
        %1355 = vmatpush1.bf16.msra.mxu0 0
        %1356 = vmatprep.subr.bf16.mxu0 0
        %1357 = vmatpush1.bf16.msra.mxu0 0
        %1358 = vmatprep.subr.bf16.mxu0 0
        %1359 = vmatpush1.bf16.msra.mxu0 0
        %1360 = vmatprep.subr.bf16.mxu0 0
        %1361 = vmatpush1.bf16.msra.mxu0 0
        %1362 = vmatprep.subr.bf16.mxu0 0
        %1363 = vmatpush1.bf16.msra.mxu0 0
        %1364 = vmatprep.subr.bf16.mxu0 0
        %1365 = vmatpush1.bf16.msra.mxu0 0
        %1366 = vmatprep.subr.bf16.mxu0 0
        %1367 = vmatpush1.bf16.msra.mxu0 0
        %1368 = vmatprep.subr.bf16.mxu0 0
        %1369 = vmatpush1.bf16.msra.mxu0 0
        %1370 = vmatprep.mubr.bf16.mxu0 0
        %1371 = vmatmul.mubr.bf16.gmra.mrb[0].mxu0 %v1333
        %v1372 = vpop.f32.mrb[0].mxu0
        %v1373 = vadd.f32 0.0, %v1372
        %v1374 = vpop.f32.mrb[0].mxu0
        %v1375 = vpop.f32.mrb[0].mxu0
        %v1376 = vpop.f32.mrb[0].mxu0
        %1377 = vdwg.mxu0
        %1378 = vrot.lane.b32.xlu0 %v509, 40
        %v1379 = vpop.permute.xlu0 %1378
        %v1381 = vsel %vm513, %v1329, 0
        %v1384 = vsel %vm641, %v1379, 0
        %1386 = vmatprep.subr.bf16.mxu0 0
        %1387 = vmatpush1.bf16.msra.mxu0 %v1384
        %1388 = vmatprep.subr.bf16.mxu0 0
        %1389 = vmatpush1.bf16.msra.mxu0 0
        %1390 = vmatprep.subr.bf16.mxu0 0
        %1391 = vmatpush1.bf16.msra.mxu0 0
        %1392 = vmatprep.subr.bf16.mxu0 0
        %1393 = vmatpush1.bf16.msra.mxu0 0
        %1394 = vmatprep.subr.bf16.mxu0 0
        %1395 = vmatpush1.bf16.msra.mxu0 0
        %1396 = vmatprep.subr.bf16.mxu0 0
        %1397 = vmatpush1.bf16.msra.mxu0 0
        %1398 = vmatprep.subr.bf16.mxu0 0
        %1399 = vmatpush1.bf16.msra.mxu0 0
        %1400 = vmatprep.subr.bf16.mxu0 0
        %1401 = vmatpush1.bf16.msra.mxu0 0
        %1402 = vmatprep.subr.bf16.mxu0 0
        %1403 = vmatpush1.bf16.msra.mxu0 0
        %1404 = vmatprep.subr.bf16.mxu0 0
        %1405 = vmatpush1.bf16.msra.mxu0 0
        %1406 = vmatprep.subr.bf16.mxu0 0
        %1407 = vmatpush1.bf16.msra.mxu0 0
        %1408 = vmatprep.subr.bf16.mxu0 0
        %1409 = vmatpush1.bf16.msra.mxu0 0
        %1410 = vmatprep.subr.bf16.mxu0 0
        %1411 = vmatpush1.bf16.msra.mxu0 0
        %1412 = vmatprep.subr.bf16.mxu0 0
        %1413 = vmatpush1.bf16.msra.mxu0 0
        %1414 = vmatprep.subr.bf16.mxu0 0
        %1415 = vmatpush1.bf16.msra.mxu0 0
        %1416 = vmatprep.subr.bf16.mxu0 0
        %1417 = vmatpush1.bf16.msra.mxu0 0
        %1418 = vmatprep.mubr.bf16.mxu0 0
        %1419 = vmatmul.mubr.bf16.gmra.mrb[0].mxu0 %v1381
        %v1420 = vpop.f32.mrb[0].mxu0
        %v1421 = vadd.f32 0.0, %v1420
        %v1422 = vpop.f32.mrb[0].mxu0
        %v1423 = vpop.f32.mrb[0].mxu0
        %v1424 = vpop.f32.mrb[0].mxu0
        %1425 = vdwg.mxu0
        %1428 = vrot.lane.b32.xlu0 %v1373, 24
        %v1429 = vpop.permute.xlu0 %1428
        %1430 = vrot.lane.b32.xlu0 %v1421, 24
        %v1431 = vpop.permute.xlu0 %1430
        %vm1434 = vcmask 261312
        %1435 = vst.msk [vmem:[#allocation2] sm:$0xff] %vm1434, %v1429
        %1436 = vst.msk [vmem:[#allocation2 + $0x8] sm:$0xff] %vm1434, %v1431
        %v1437 = vld [vmem:[#allocation2] sm:$0xff]
        %v1438 = vld [vmem:[#allocation2 + $0x8] sm:$0xff]
        %v1439 = vpack.c.bf16 %v1438, %v1437
        %v1440 = vld [vmem:[%s381] sm:$0xf]
        %v1441 = vld [vmem:[%s381 + $0x4] sm:$0xf]
        %v1442 = vld [vmem:[%s381 + $0x8] sm:$0xf]
        %v1443 = vld [vmem:[%s381 + $0xc] sm:$0xf]
        %v1444 = vld [vmem:[%s396 + $0x3] sm:$0x1]
        %v1445 = vlaneseq
        %v1446 = vshrl.u32 %v1445, 7
        %v1447 = vsub.s32 0, %v1446
        %v1448 = vrot.slane %v1444, %v1447
        %v1453 = vunpack.c.l.b16 %v1440
        %v1454 = vunpack.c.l.b16 %v1441
        %v1455 = vunpack.c.l.b16 %v1442
        %v1456 = vunpack.c.l.b16 %v1443
        %v1457 = vpack.c.b16 %v1454, %v1453
        %v1458 = vpack.c.b16 %v1456, %v1455
        %v1462 = vsel %vm430, %v1439, 0
        %1464 = vmatprep.subr.bf16.mxu0 0
        %1465 = vmatpush1.bf16.msra.mxu0 %v1457
        %1466 = vmatprep.subr.bf16.mxu0 0
        %1467 = vmatpush1.bf16.msra.mxu0 %v1458
        %1468 = vmatprep.subr.bf16.mxu0 0
        %1469 = vmatpush1.bf16.msra.mxu0 0
        %1470 = vmatprep.subr.bf16.mxu0 0
        %1471 = vmatpush1.bf16.msra.mxu0 0
        %1472 = vmatprep.subr.bf16.mxu0 0
        %1473 = vmatpush1.bf16.msra.mxu0 0
        %1474 = vmatprep.subr.bf16.mxu0 0
        %1475 = vmatpush1.bf16.msra.mxu0 0
        %1476 = vmatprep.subr.bf16.mxu0 0
        %1477 = vmatpush1.bf16.msra.mxu0 0
        %1478 = vmatprep.subr.bf16.mxu0 0
        %1479 = vmatpush1.bf16.msra.mxu0 0
        %1480 = vmatprep.subr.bf16.mxu0 0
        %1481 = vmatpush1.bf16.msra.mxu0 0
        %1482 = vmatprep.subr.bf16.mxu0 0
        %1483 = vmatpush1.bf16.msra.mxu0 0
        %1484 = vmatprep.subr.bf16.mxu0 0
        %1485 = vmatpush1.bf16.msra.mxu0 0
        %1486 = vmatprep.subr.bf16.mxu0 0
        %1487 = vmatpush1.bf16.msra.mxu0 0
        %1488 = vmatprep.subr.bf16.mxu0 0
        %1489 = vmatpush1.bf16.msra.mxu0 0
        %1490 = vmatprep.subr.bf16.mxu0 0
        %1491 = vmatpush1.bf16.msra.mxu0 0
        %1492 = vmatprep.subr.bf16.mxu0 0
        %1493 = vmatpush1.bf16.msra.mxu0 0
        %1494 = vmatprep.subr.bf16.mxu0 0
        %1495 = vmatpush1.bf16.msra.mxu0 0
        %1496 = vmatprep.mubr.bf16.mxu0 0
        %1497 = vmatmul.mubr.bf16.gmra.mrb[0].mxu0 %v1462
        %v1498 = vpop.f32.mrb[0].mxu0
        %v1499 = vadd.f32 %v1448, %v1498
        %v1500 = vpop.f32.mrb[0].mxu0
        %v1501 = vpop.f32.mrb[0].mxu0
        %v1502 = vadd.f32 %v1448, %v1501
        %v1503 = vpop.f32.mrb[0].mxu0
        %1504 = vdwg.mxu0
        %v1505 = vadd.f32 %v411, %v1499
        %v1506 = vadd.f32 %v412, %v1502
        %v1507 = vsel %vm430, %v1505, 0.0
        %1508 = vadd.xlane.f32.xlu0 %v1507
        %v1509 = vpop.xlane.xlu0 %1508
        %v1510 = vsel %vm430, %v1506, 0.0
        %1511 = vadd.xlane.f32.xlu0 %v1510
        %v1512 = vpop.xlane.xlu0 %1511
        %v1513 = vrcp.pop 32.0
        %v1514 = vmul.f32 %v1509, %v1513
        %v1515 = vmul.f32 %v1512, %v1513
        %v1516 = vmul.f32 %v1505, %v1505
        %v1517 = vmul.f32 %v1506, %v1506
        %v1518 = vsel %vm430, %v1516, 0.0
        %1519 = vadd.xlane.f32.xlu0 %v1518
        %v1520 = vpop.xlane.xlu0 %1519
        %v1521 = vsel %vm430, %v1517, 0.0
        %1522 = vadd.xlane.f32.xlu0 %v1521
        %v1523 = vpop.xlane.xlu0 %1522
        %v1524 = vmul.f32 %v1520, %v1513
        %v1525 = vmul.f32 %v1523, %v1513
        %v1526 = vmul.f32 %v1514, %v1514
        %v1527 = vmul.f32 %v1515, %v1515
        %v1528 = vsub.f32 %v1524, %v1526
        %v1529 = vsub.f32 %v1525, %v1527
        %v1530 = vsub.f32 %v1505, %v1514
        %v1531 = vsub.f32 %v1506, %v1515
        %v1532 = vadd.f32 %v1528, 1e-05
        %v1533 = vadd.f32 %v1529, 1e-05
        %v1534 = vrsqrt.pop %v1532
        %v1535 = vrsqrt.pop %v1533
        %v1536 = vmul.f32 %v1530, %v1534
        %v1537 = vmul.f32 %v1531, %v1535
        %v1538 = vld [vmem:[%s396 + $0x4] sm:$0x1]
        %v1539 = vlaneseq
        %v1540 = vshrl.u32 %v1539, 7
        %v1541 = vsub.s32 0, %v1540
        %v1542 = vrot.slane %v1538, %v1541
        %v1543 = vmul.f32 %v1536, %v1542
        %v1544 = vmul.f32 %v1537, %v1542
        %v1545 = vld [vmem:[%s396 + $0x5] sm:$0x1]
        %v1546 = vlaneseq
        %v1547 = vshrl.u32 %v1546, 7
        %v1548 = vsub.s32 0, %v1547
        %v1549 = vrot.slane %v1545, %v1548
        %v1550 = vadd.f32 %v1543, %v1549
        %v1551 = vadd.f32 %v1544, %v1549
        %v1552 = vpack.c.bf16 %v1551, %v1550
        %v1553 = vld [vmem:[%s386] sm:$0xf]
        %v1554 = vld [vmem:[%s386 + $0x4] sm:$0xf]
        %v1555 = vld [vmem:[%s386 + $0x8] sm:$0xf]
        %v1556 = vld [vmem:[%s386 + $0xc] sm:$0xf]
        %v1557 = vld [vmem:[%s396 + $0x6] sm:$0x1]
        %v1558 = vlaneseq
        %v1559 = vshrl.u32 %v1558, 7
        %v1560 = vsub.s32 0, %v1559
        %v1561 = vrot.slane %v1557, %v1560
        %v1566 = vunpack.c.l.b16 %v1553
        %v1567 = vunpack.c.l.b16 %v1554
        %v1568 = vunpack.c.l.b16 %v1555
        %v1569 = vunpack.c.l.b16 %v1556
        %v1570 = vpack.c.b16 %v1567, %v1566
        %v1571 = vpack.c.b16 %v1569, %v1568
        %v1575 = vsel %vm430, %v1552, 0
        %1577 = vmatprep.subr.bf16.mxu0 0
        %1578 = vmatpush1.bf16.msra.mxu0 %v1570
        %1579 = vmatprep.subr.bf16.mxu0 0
        %1580 = vmatpush1.bf16.msra.mxu0 %v1571
        %1581 = vmatprep.subr.bf16.mxu0 0
        %1582 = vmatpush1.bf16.msra.mxu0 0
        %1583 = vmatprep.subr.bf16.mxu0 0
        %1584 = vmatpush1.bf16.msra.mxu0 0
        %1585 = vmatprep.subr.bf16.mxu0 0
        %1586 = vmatpush1.bf16.msra.mxu0 0
        %1587 = vmatprep.subr.bf16.mxu0 0
        %1588 = vmatpush1.bf16.msra.mxu0 0
        %1589 = vmatprep.subr.bf16.mxu0 0
        %1590 = vmatpush1.bf16.msra.mxu0 0
        %1591 = vmatprep.subr.bf16.mxu0 0
        %1592 = vmatpush1.bf16.msra.mxu0 0
        %1593 = vmatprep.subr.bf16.mxu0 0
        %1594 = vmatpush1.bf16.msra.mxu0 0
        %1595 = vmatprep.subr.bf16.mxu0 0
        %1596 = vmatpush1.bf16.msra.mxu0 0
        %1597 = vmatprep.subr.bf16.mxu0 0
        %1598 = vmatpush1.bf16.msra.mxu0 0
        %1599 = vmatprep.subr.bf16.mxu0 0
        %1600 = vmatpush1.bf16.msra.mxu0 0
        %1601 = vmatprep.subr.bf16.mxu0 0
        %1602 = vmatpush1.bf16.msra.mxu0 0
        %1603 = vmatprep.subr.bf16.mxu0 0
        %1604 = vmatpush1.bf16.msra.mxu0 0
        %1605 = vmatprep.subr.bf16.mxu0 0
        %1606 = vmatpush1.bf16.msra.mxu0 0
        %1607 = vmatprep.subr.bf16.mxu0 0
        %1608 = vmatpush1.bf16.msra.mxu0 0
        %1609 = vmatprep.mubr.bf16.mxu0 0
        %1610 = vmatmul.mubr.bf16.gmra.mrb[0].mxu0 %v1575
        %v1611 = vpop.f32.mrb[0].mxu0
        %v1612 = vadd.f32 %v1561, %v1611
        %v1613 = vpop.f32.mrb[0].mxu0
        %v1614 = vpop.f32.mrb[0].mxu0
        %v1615 = vadd.f32 %v1561, %v1614
        %v1616 = vpop.f32.mrb[0].mxu0
        %1617 = vdwg.mxu0
        %v1618 = vmax.f32 %v1612, 0.0
        %v1619 = vmax.f32 %v1615, 0.0
        %v1620 = vpack.c.bf16 %v1619, %v1618
        %v1621 = vld [vmem:[%s391] sm:$0xf]
        %v1622 = vld [vmem:[%s391 + $0x4] sm:$0xf]
        %v1623 = vld [vmem:[%s391 + $0x8] sm:$0xf]
        %v1624 = vld [vmem:[%s391 + $0xc] sm:$0xf]
        %v1625 = vld [vmem:[%s391 + $0x10] sm:$0xf]
        %v1626 = vld [vmem:[%s391 + $0x14] sm:$0xf]
        %v1627 = vld [vmem:[%s391 + $0x18] sm:$0xf]
        %v1628 = vld [vmem:[%s391 + $0x1c] sm:$0xf]
        %v1629 = vld [vmem:[%s396 + $0x7] sm:$0x1]
        %v1630 = vlaneseq
        %v1631 = vshrl.u32 %v1630, 7
        %v1632 = vsub.s32 0, %v1631
        %v1633 = vrot.slane %v1629, %v1632
        %v1642 = vunpack.c.l.b16 %v1621
        %v1643 = vunpack.c.l.b16 %v1622
        %v1644 = vunpack.c.l.b16 %v1623
        %v1645 = vunpack.c.l.b16 %v1624
        %v1646 = vunpack.c.l.b16 %v1625
        %v1647 = vunpack.c.l.b16 %v1626
        %v1648 = vunpack.c.l.b16 %v1627
        %v1649 = vunpack.c.l.b16 %v1628
        %v1650 = vpack.c.b16 %v1643, %v1642
        %v1651 = vpack.c.b16 %v1645, %v1644
        %v1652 = vpack.c.b16 %v1647, %v1646
        %v1653 = vpack.c.b16 %v1649, %v1648
        %vm1658 = vcmask 523264
        %v1660 = vsel %vm1658, %v1620, 0
        %1662 = vmatprep.subr.bf16.mxu0 0
        %1663 = vmatpush1.bf16.msra.mxu0 %v1650
        %1664 = vmatprep.subr.bf16.mxu0 0
        %1665 = vmatpush1.bf16.msra.mxu0 %v1651
        %1666 = vmatprep.subr.bf16.mxu0 0
        %1667 = vmatpush1.bf16.msra.mxu0 %v1652
        %1668 = vmatprep.subr.bf16.mxu0 0
        %1669 = vmatpush1.bf16.msra.mxu0 %v1653
        %1670 = vmatprep.subr.bf16.mxu0 0
        %1671 = vmatpush1.bf16.msra.mxu0 0
        %1672 = vmatprep.subr.bf16.mxu0 0
        %1673 = vmatpush1.bf16.msra.mxu0 0
        %1674 = vmatprep.subr.bf16.mxu0 0
        %1675 = vmatpush1.bf16.msra.mxu0 0
        %1676 = vmatprep.subr.bf16.mxu0 0
        %1677 = vmatpush1.bf16.msra.mxu0 0
        %1678 = vmatprep.subr.bf16.mxu0 0
        %1679 = vmatpush1.bf16.msra.mxu0 0
        %1680 = vmatprep.subr.bf16.mxu0 0
        %1681 = vmatpush1.bf16.msra.mxu0 0
        %1682 = vmatprep.subr.bf16.mxu0 0
        %1683 = vmatpush1.bf16.msra.mxu0 0
        %1684 = vmatprep.subr.bf16.mxu0 0
        %1685 = vmatpush1.bf16.msra.mxu0 0
        %1686 = vmatprep.subr.bf16.mxu0 0
        %1687 = vmatpush1.bf16.msra.mxu0 0
        %1688 = vmatprep.subr.bf16.mxu0 0
        %1689 = vmatpush1.bf16.msra.mxu0 0
        %1690 = vmatprep.subr.bf16.mxu0 0
        %1691 = vmatpush1.bf16.msra.mxu0 0
        %1692 = vmatprep.subr.bf16.mxu0 0
        %1693 = vmatpush1.bf16.msra.mxu0 0
        %1694 = vmatprep.mubr.bf16.mxu0 0
        %1695 = vmatmul.mubr.bf16.gmra.mrb[0].mxu0 %v1660
        %v1696 = vpop.f32.mrb[0].mxu0
        %v1697 = vadd.f32 %v1633, %v1696
        %v1698 = vpop.f32.mrb[0].mxu0
        %v1699 = vpop.f32.mrb[0].mxu0
        %v1700 = vadd.f32 %v1633, %v1699
        %v1701 = vpop.f32.mrb[0].mxu0
        %1702 = vdwg.mxu0
        %v1703 = vadd.f32 %v1550, %v1697
        %v1704 = vadd.f32 %v1551, %v1700
        %v1705 = vsel %vm430, %v1703, 0.0
        %1706 = vadd.xlane.f32.xlu0 %v1705
        %v1707 = vpop.xlane.xlu0 %1706
        %v1708 = vsel %vm430, %v1704, 0.0
        %1709 = vadd.xlane.f32.xlu0 %v1708
        %v1710 = vpop.xlane.xlu0 %1709
        %v1711 = vmul.f32 %v1707, %v1513
        %v1712 = vmul.f32 %v1710, %v1513
        %v1713 = vmul.f32 %v1703, %v1703
        %v1714 = vmul.f32 %v1704, %v1704
        %v1715 = vsel %vm430, %v1713, 0.0
        %1716 = vadd.xlane.f32.xlu0 %v1715
        %v1717 = vpop.xlane.xlu0 %1716
        %v1718 = vsel %vm430, %v1714, 0.0
        %1719 = vadd.xlane.f32.xlu0 %v1718
        %v1720 = vpop.xlane.xlu0 %1719
        %v1721 = vmul.f32 %v1717, %v1513
        %v1722 = vmul.f32 %v1720, %v1513
        %v1723 = vmul.f32 %v1711, %v1711
        %v1724 = vmul.f32 %v1712, %v1712
        %v1725 = vsub.f32 %v1721, %v1723
        %v1726 = vsub.f32 %v1722, %v1724
        %v1727 = vsub.f32 %v1703, %v1711
        %v1728 = vsub.f32 %v1704, %v1712
        %v1729 = vadd.f32 %v1725, 1e-05
        %v1730 = vadd.f32 %v1726, 1e-05
        %v1731 = vrsqrt.pop %v1729
        %v1732 = vrsqrt.pop %v1730
        %v1733 = vmul.f32 %v1727, %v1731
        %v1734 = vmul.f32 %v1728, %v1732
        %v1735 = vld [vmem:[%s396 + $0x8] sm:$0x1]
        %v1736 = vlaneseq
        %v1737 = vshrl.u32 %v1736, 7
        %v1738 = vsub.s32 0, %v1737
        %v1739 = vrot.slane %v1735, %v1738
        %v1740 = vmul.f32 %v1733, %v1739
        %v1741 = vmul.f32 %v1734, %v1739
        %v1742 = vld [vmem:[%s396 + $0x9] sm:$0x1]
        %v1743 = vlaneseq
        %v1744 = vshrl.u32 %v1743, 7
        %v1745 = vsub.s32 0, %v1744
        %v1746 = vrot.slane %v1742, %v1745
        %v1747 = vadd.f32 %v1740, %v1746
        %v1748 = vadd.f32 %v1741, %v1746
        %1749 = vst.msk [vmem:[#allocation6] sm:$0xff] %vm430, %v1747
        %1750 = vst.msk [vmem:[#allocation6 + $0x8] sm:$0xff] %vm430, %v1748
        // Predicated region
        $region57: #{tpu_custom_call.1} parent=47 // pred_check
          %p1751 = pneg %p227
        $region58: #{tpu_custom_call.1} parent=47 // pred_check_branch
          %1753 = sbr.rel (%p1751) target = $region60
        $region59: #{tpu_custom_call.1} parent=47 // pred_region
          %s1754 = smul.u32 2, %s24
          %s1756 = ssub.s32 256, 256
          %1757 = vsyncadd [#allocation5], %s1756
          %s1758 = smul.addr %s1754, 128
          %s1759 = scalar_lea.hbm %s7, %s1758
          %s1760 = sshll.u32 [#allocation6], 4
          %s1761 = int_to_ptr.vmem [resolvable:$true] %s1760
          %1766 = dma.vmem_to_hbm [thread:$0]  %s1761, 256, %s1759, [#allocation5], 128, 128, 8
        $region60: #{tpu_custom_call.1} parent=47 // pred_fallthru
          _
        // Predicated region
        $region61: #{tpu_custom_call.1} parent=47 // pred_check
          %p1767 = pneg %p227
        $region62: #{tpu_custom_call.1} parent=47 // pred_check_branch
          %1769 = sbr.rel (%p1767) target = $region64
        $region63: #{tpu_custom_call.1} parent=47 // pred_region
          %1770 = dma.done [#allocation5], 256
        $region64: #{tpu_custom_call.1} parent=47 // pred_fallthru
          _
      $region48: #{tpu_custom_call.1} parent=5 // pred_fallthru
        _
      %p1771 = scmp.le.s32.totalorder 2, %s15
      // Predicated region
      $region65: #{tpu_custom_call.1} parent=5 // pred_check
        %p1772 = pneg %p1771
      $region66: #{tpu_custom_call.1} parent=5 // pred_check_branch
        %1774 = sbr.rel (%p1772) target = $region68
      $region67: #{tpu_custom_call.1} parent=5 // pred_region
        %s1775 = ssub.s32 %s15, 2
      $region68: #{tpu_custom_call.1} parent=5 // pred_fallthru
        _
    $region6: #{tpu_custom_call.1} parent=1 // loop_footer
      %s19 = sadd.s32 1, %s15
    $region7: #{tpu_custom_call.1} parent=1 // loop_footer_branch
      %14 = sbr.rel target = $region3
    $region8: #{tpu_custom_call.1} parent=1 // loop_exit
      _
    %1776 = vsyncpa [#allocation4], 1
    %s1777 = scalar_lea.sflag [#allocation4], 1
    %1778 = vsyncpa %s1777, 1
    %1779 = vsyncpa [#allocation5], 1
    %s1780 = scalar_lea.sflag [#allocation5], 1
    %1781 = vsyncpa %s1780, 1

</llo_original>
